<compile_context>
chip_gen: v5e
topology: v5e:2x2
jax: 0.10.0
libtpu: 0.0.40
codegen_flags: <defaults>
</compile_context>

<pallas_src>
import functools
import math

import jax
import jax.numpy as jnp
from jax.experimental import pallas as pl
from jax.experimental.pallas import tpu as pltpu

BN_EPS = 1e-5
COMPUTE_DTYPE = jnp.bfloat16           # MXU operand / intermediate activation dtype
VMEM_LIMIT_BYTES = 40 * 1024 * 1024    # fits v7x's 64 MiB/TC with headroom; v5e/v6e trivially


def _pick_h_tile(H, W):
    """Largest even divisor of H that (a) yields at least two H tiles and
    (b) keeps the matmul M-dim (th*W rows) <= 512.  Falls back to the full H."""
    cands = [t for t in range(2, H, 2) if H % t == 0 and t * W <= 512]
    return max(cands) if cands else H


# ----------------------------------------------------------------------------
# Kernel helpers
# ----------------------------------------------------------------------------
def _fill_padded_window(x_ref, xp_ref, *, th, H, W):
    """Zero-pad the current H-tile's (th+2, W+2, Cin) input window into VMEM
    scratch.  Conv padding lives entirely in VMEM, so no conv ever stores a
    halo to HBM."""
    h = pl.program_id(1)
    row0 = h * th

    xp_ref[...] = jnp.zeros_like(xp_ref)
    xp_ref[1:th + 1, 1:W + 1, :] = x_ref[0, pl.ds(row0, th), :, :].astype(xp_ref.dtype)

    @pl.when(h > 0)
    def _():
        top = jnp.maximum(row0 - 1, 0)          # clamp: pure safety, pl.when guards semantics
        xp_ref[0:1, 1:W + 1, :] = x_ref[0, pl.ds(top, 1), :, :].astype(xp_ref.dtype)

    @pl.when(h < pl.num_programs(1) - 1)
    def _():
        bot = jnp.minimum(row0 + th, H - 1)
        xp_ref[th + 1:th + 2, 1:W + 1, :] = x_ref[0, pl.ds(bot, 1), :, :].astype(xp_ref.dtype)


def _conv_bn_relu(xp_ref, w_ref, s_ref, b_ref, *, th, W):
    """One im2col slab + ONE deep MXU contraction + fused BN affine + ReLU.
    Returns (th*W, co_blk) f32."""
    xp = xp_ref[...]                                      # (th+2, W+2, Cin) f32
    cin = xp.shape[-1]
    cols = [xp[kh:kh + th, kw:kw + W, :]                  # nine shifted taps ...
            for kh in range(3) for kw in range(3)]
    lhs = jnp.concatenate(cols, axis=-1)                  # ... merged along K (lanes)
    lhs = lhs.reshape(th * W, 9 * cin).astype(w_ref.dtype)  # single bf16 cast of the slab
    acc = jnp.dot(lhs, w_ref[...], preferred_element_type=jnp.float32)
    return jnp.maximum(acc * s_ref[...] + b_ref[...], 0.0)


def _conv_kernel(x_ref, w_ref, s_ref, b_ref, o_ref, xp_ref, *, th, H, W):
    _fill_padded_window(x_ref, xp_ref, th=th, H=H, W=W)
    y = _conv_bn_relu(xp_ref, w_ref, s_ref, b_ref, th=th, W=W)
    o_ref[0] = y.reshape(th, W, o_ref.shape[-1]).astype(o_ref.dtype)


def _conv_pool_kernel(x_ref, w_ref, s_ref, b_ref, p_ref, o_ref, xp_ref, *, th, H, W):
    _fill_padded_window(x_ref, xp_ref, th=th, H=H, W=W)
    y = _conv_bn_relu(xp_ref, w_ref, s_ref, b_ref, th=th, W=W)
    # Fused 2x2 average pool: a (th*W/4, th*W) 0/1 matmul on the idle MXU.
    pooled = jnp.dot(p_ref[...], y.astype(p_ref.dtype),
                     preferred_element_type=jnp.float32) * 0.25
    o_ref[0] = pooled.reshape(th // 2, W // 2, o_ref.shape[-1]).astype(o_ref.dtype)


# ----------------------------------------------------------------------------
# Wrappers around pallas_call
# ----------------------------------------------------------------------------
def _make_pool_matrix(th, W):
    """0/1 matrix P of shape (th*W/4, th*W): P[o, i] = 1 iff input pixel i lies
    in the 2x2 window of pooled pixel o (local to one H tile)."""
    tho, wo = th // 2, W // 2
    o = jnp.arange(tho * wo)
    i = jnp.arange(th * W)
    same_h = (i[None, :] // W) // 2 == o[:, None] // wo
    same_w = (i[None, :] % W) // 2 == o[:, None] % wo
    return (same_h & same_w).astype(COMPUTE_DTYPE)


def conv3x3_bn_relu(x, w9, scale, shift, *, out_dtype, fuse_avg_pool):
    """Fused 3x3 conv (stride 1, pad 1) + eval-mode BN affine + ReLU
    [+ fused 2x2 average pool].

    x     : (N, H, W, Cin) NHWC (f32 or bf16)
    w9    : (9*Cin, Co) tap-major weights (bf16)
    scale : (1, Co) f32     shift: (1, Co) f32
    Returns (N, H, W, Co) if not pooled else (N, H//2, W//2, Co), dtype out_dtype.
    """
    N, H, W, Cin = x.shape
    Co = w9.shape[-1]

    # Co (lane) tiling: full extent, or 128-multiples when possible, so the
    # minor block dim stays legal and stores stay as lane-dense as Co allows.
    co_blk = 128 if (Co > 128 and Co % 128 == 0) else Co
    n_co = Co // co_blk
    th = _pick_h_tile(H, W)
    n_h = H // th

    in_specs = [
        # Whole (unpadded) image stays VMEM-resident across the h/co axes; the
        # kernel slices its (th+2)-row window out of it.
        # TODO(synk): for very large feature maps this should become a manually
        # DMA'd halo tile (memory_space=pl.ANY) to respect v7x's 64 MiB VMEM.
        pl.BlockSpec((1, H, W, Cin), lambda n, h, c: (n, 0, 0, 0)),
        pl.BlockSpec((9 * Cin, co_blk), lambda n, h, c: (0, c)),
        pl.BlockSpec((1, co_blk), lambda n, h, c: (0, c)),
        pl.BlockSpec((1, co_blk), lambda n, h, c: (0, c)),
    ]
    scratch_shapes = [pltpu.VMEM((th + 2, W + 2, Cin), jnp.float32)]
    compiler_params = pltpu.CompilerParams(
        dimension_semantics=("parallel", "parallel", "parallel"),
        vmem_limit_bytes=VMEM_LIMIT_BYTES)

    if fuse_avg_pool:
        assert th % 2 == 0 and W % 2 == 0, "2x2 pooling needs even spatial dims"
        pool_mat = _make_pool_matrix(th, W)
        return pl.pallas_call(
            functools.partial(_conv_pool_kernel, th=th, H=H, W=W),
            grid=(N, n_h, n_co),
            in_specs=in_specs + [
                pl.BlockSpec((th * W // 4, th * W), lambda n, h, c: (0, 0))],
            out_specs=pl.BlockSpec((1, th // 2, W // 2, co_blk),
                                   lambda n, h, c: (n, h, 0, c)),
            out_shape=jax.ShapeDtypeStruct((N, H // 2, W // 2, Co), out_dtype),
            scratch_shapes=scratch_shapes,
            compiler_params=compiler_params,
        )(x, w9, scale, shift, pool_mat)

    return pl.pallas_call(
        functools.partial(_conv_kernel, th=th, H=H, W=W),
        grid=(N, n_h, n_co),
        in_specs=in_specs,
        out_specs=pl.BlockSpec((1, th, W, co_blk), lambda n, h, c: (n, h, 0, c)),
        out_shape=jax.ShapeDtypeStruct((N, H, W, Co), out_dtype),
        scratch_shapes=scratch_shapes,
        compiler_params=compiler_params,
    )(x, w9, scale, shift)


# ----------------------------------------------------------------------------
# Parameters (deterministic, in-script), matching ConvBlock.init_weights()
# ----------------------------------------------------------------------------
def init_convblock_params(key, in_channels, out_channels):
    k1, k2 = jax.random.split(key)

    def he_uniform(k, cout, cin):          # init_layer for a conv weight (OIHW)
        n = cin * 3 * 3
        s = math.sqrt(2.0 / n) * math.sqrt(3.0)
        return jax.random.uniform(k, (cout, cin, 3, 3), jnp.float32, -s, s)

    def bn_fold(c):
        # TODO(synk): BatchNorm is folded as an eval-mode affine using the fresh
        # running stats (mean=0, var=1, gamma=1, beta=0); training-mode batch
        # statistics / running-stat updates are not implemented.
        scale = jnp.full((1, c), 1.0 / math.sqrt(1.0 + BN_EPS), jnp.float32)
        shift = jnp.zeros((1, c), jnp.float32)
        return scale, shift

    def prep(w_oihw):
        # OIHW -> (kh, kw, cin, co) -> (9*cin, co); cast to the MXU operand
        # dtype ONCE here, not per forward call.  Row ordering matches the
        # kernel's (kh, kw, cin) im2col concat order.
        co, ci = w_oihw.shape[0], w_oihw.shape[1]
        return (jnp.transpose(w_oihw, (2, 3, 1, 0))
                   .reshape(9 * ci, co).astype(COMPUTE_DTYPE))

    w1 = he_uniform(k1, out_channels, in_channels)
    w2 = he_uniform(k2, out_channels, out_channels)
    s1, b1 = bn_fold(out_channels)
    s2, b2 = bn_fold(out_channels)
    return {
        'w1': prep(w1), 'w2': prep(w2),
        's1': s1, 'b1': b1, 's2': s2, 'b2': b2,
        # f32 OIHW copies kept only for the pure-JAX reference check below.
        'w1_ref': w1, 'w2_ref': w2,
    }


# ----------------------------------------------------------------------------
# Forward (ConvBlock.forward semantics) and a pure-JAX reference
# ----------------------------------------------------------------------------
def conv_block_forward(params, x, pool_type='avg'):
    """x: (N, Cin, H, W) NCHW float32.  Returns (N, Co, H//2, W//2) float32."""
    N, Cin, H, W = x.shape

    # Single layout change at the block boundary: NCHW -> NHWC.
    xh = jnp.transpose(x, (0, 2, 3, 1))

    # conv1 + BN1 + ReLU -> UNPADDED bf16 intermediate (halves inter-conv HBM).
    h1 = conv3x3_bn_relu(xh, params['w1'], params['s1'], params['b1'],
                         out_dtype=COMPUTE_DTYPE, fuse_avg_pool=False)

    if pool_type == 'avg':
        # conv2 + BN2 + ReLU + fused 2x2 average pool, all in one kernel.
        h2 = conv3x3_bn_relu(h1, params['w2'], params['s2'], params['b2'],
                             out_dtype=jnp.float32, fuse_avg_pool=True)
    elif pool_type == 'max':
        # TODO(synk): max pool is not fused into the conv2 epilogue (the strided
        # sublane max does not lower cleanly); it runs as an XLA reshape-reduce.
        h2 = conv3x3_bn_relu(h1, params['w2'], params['s2'], params['b2'],
                             out_dtype=jnp.float32, fuse_avg_pool=False)
        h2 = h2.reshape(N, H // 2, 2, W // 2, 2, -1).max(axis=(2, 4))
    else:
        raise Exception('Incorrect argument!')

    # Back to the PyTorch NCHW interface.
    return jnp.transpose(h2, (0, 3, 1, 2))


def conv_block_reference(params, x, pool_type='avg'):
    """Pure-JAX float32 reference (same eval-mode BN fold)."""
    def conv_bn_relu(y, w_oihw, scale, shift):
        y = jax.lax.conv_general_dilated(
            y, w_oihw, window_strides=(1, 1), padding=((1, 1), (1, 1)),
            dimension_numbers=('NCHW', 'OIHW', 'NCHW'))
        c = w_oihw.shape[0]
        y = y * scale.reshape(1, c, 1, 1) + shift.reshape(1, c, 1, 1)
        return jnp.maximum(y, 0.0)

    y = conv_bn_relu(x, params['w1_ref'], params['s1'], params['b1'])
    y = conv_bn_relu(y, params['w2_ref'], params['s2'], params['b2'])
    N, C, H, W = y.shape
    y = y.reshape(N, C, H // 2, 2, W // 2, 2)
    return y.mean(axis=(3, 5)) if pool_type == 'avg' else y.max(axis=(3, 5))


# ----------------------------------------------------------------------------
if __name__ == "__main__":
    key = jax.random.PRNGKey(0)
    pkey, xkey = jax.random.split(key)

    batch, in_channels, out_channels = 2, 4, 16
    H = W = 16

    params = init_convblock_params(pkey, in_channels, out_channels)
    x = jax.random.normal(xkey, (batch, in_channels, H, W), jnp.float32)

    fwd = jax.jit(conv_block_forward, static_argnames=("pool_type",))
    out = jax.block_until_ready(fwd(params, x, pool_type='avg'))

    assert out.shape == (batch, out_channels, H // 2, W // 2), out.shape
    assert bool(jnp.all(jnp.isfinite(out)))

    # Sanity-check against a pure-JAX f32 reference (bf16 MXU operands and a
    # bf16 intermediate activation -> loose tolerance).
    ref = conv_block_reference(params, x, 'avg')
    max_err = float(jnp.max(jnp.abs(out - ref)))
    assert max_err < 1e-1, f"max abs err vs reference: {max_err}"

    print("KERNEL_OK")
</pallas_src>

<mosaic_0001>
module attributes {stable_mosaic.version = 11 : i64} {
  func.func @_conv_kernel(%arg0: i32, %arg1: i32, %arg2: i32, %arg3: memref<1x16x16x4xf32, #tpu.memory_space<vmem>>, %arg4: memref<36x16xbf16, #tpu.memory_space<vmem>>, %arg5: memref<1x16xf32, #tpu.memory_space<vmem>>, %arg6: memref<1x16xf32, #tpu.memory_space<vmem>>, %arg7: memref<1x8x16x16xbf16, #tpu.memory_space<vmem>>, %arg8: memref<10x18x4xf32, #tpu.memory_space<vmem>>) attributes {dimension_semantics = [#tpu.dimension_semantics<parallel>, #tpu.dimension_semantics<parallel>, #tpu.dimension_semantics<parallel>], iteration_bounds = array<i64: 2, 2, 1>, scalar_prefetch = 0 : i64, scratch_operands = 1 : i64, tpu.core_type = #tpu.core_type<tc>, window_params = [{transform_indices = @transform_0, window_bounds = array<i64: 1, 16, 16, 4>}, {transform_indices = @transform_1, window_bounds = array<i64: 36, 16>}, {transform_indices = @transform_2, window_bounds = array<i64: 1, 16>}, {transform_indices = @transform_3, window_bounds = array<i64: 1, 16>}, {transform_indices = @transform_4, window_bounds = array<i64: 1, 8, 16, 16>}]} {
    %c8_i32 = arith.constant 8 : i32
    %0 = arith.muli %arg1, %c8_i32 : i32
    %cst = arith.constant 0.000000e+00 : f32
    %1 = vector.broadcast %cst : f32 to vector<10x18x4xf32>
    %c0 = arith.constant 0 : index
    %c0_0 = arith.constant 0 : index
    %c0_1 = arith.constant 0 : index
    %2 = vector.load %arg8[%c0, %c0_0, %c0_1] : memref<10x18x4xf32, #tpu.memory_space<vmem>>, vector<10x18x4xf32>
    tpu.vector_store %arg8[%c0, %c0_0, %c0_1], %1 {strides = array<i32>} : memref<10x18x4xf32, #tpu.memory_space<vmem>>, vector<10x18x4xf32>,
    %c0_2 = arith.constant 0 : index
    %3 = arith.index_cast %0 : i32 to index
    %c0_3 = arith.constant 0 : index
    %c0_4 = arith.constant 0 : index
    %4 = vector.load %arg3[%c0_2, %3, %c0_3, %c0_4] : memref<1x16x16x4xf32, #tpu.memory_space<vmem>>, vector<1x8x16x4xf32>
    %5 = vector.shape_cast %4 : vector<1x8x16x4xf32> to vector<8x16x4xf32>
    %c1 = arith.constant 1 : index
    %c1_5 = arith.constant 1 : index
    %c0_6 = arith.constant 0 : index
    %6 = vector.load %arg8[%c1, %c1_5, %c0_6] : memref<10x18x4xf32, #tpu.memory_space<vmem>>, vector<8x16x4xf32>
    tpu.vector_store %arg8[%c1, %c1_5, %c0_6], %5 {strides = array<i32>} : memref<10x18x4xf32, #tpu.memory_space<vmem>>, vector<8x16x4xf32>,
    %c0_i32 = arith.constant 0 : i32
    %7 = arith.cmpi sgt, %arg1, %c0_i32 : i32
    %8 = arith.extui %7 : i1 to i32
    %c0_i32_7 = arith.constant 0 : i32
    %9 = arith.cmpi ne, %8, %c0_i32_7 : i32
    scf.if %9 {
      %c1_i32_24 = arith.constant 1 : i32
      %41 = arith.subi %0, %c1_i32_24 : i32
      %c0_i32_25 = arith.constant 0 : i32
      %42 = arith.maxsi %41, %c0_i32_25 : i32
      %c0_26 = arith.constant 0 : index
      %43 = arith.index_cast %42 : i32 to index
      %c0_27 = arith.constant 0 : index
      %c0_28 = arith.constant 0 : index
      %44 = vector.load %arg3[%c0_26, %43, %c0_27, %c0_28] : memref<1x16x16x4xf32, #tpu.memory_space<vmem>>, vector<1x1x16x4xf32>
      %45 = vector.shape_cast %44 : vector<1x1x16x4xf32> to vector<1x16x4xf32>
      %c0_29 = arith.constant 0 : index
      %c1_30 = arith.constant 1 : index
      %c0_31 = arith.constant 0 : index
      %46 = vector.load %arg8[%c0_29, %c1_30, %c0_31] : memref<10x18x4xf32, #tpu.memory_space<vmem>>, vector<1x16x4xf32>
      tpu.vector_store %arg8[%c0_29, %c1_30, %c0_31], %45 {strides = array<i32>} : memref<10x18x4xf32, #tpu.memory_space<vmem>>, vector<1x16x4xf32>,
    } else {
    }
    %c1_i32 = arith.constant 1 : i32
    %10 = arith.cmpi slt, %arg1, %c1_i32 : i32
    %11 = arith.extui %10 : i1 to i32
    %c0_i32_8 = arith.constant 0 : i32
    %12 = arith.cmpi ne, %11, %c0_i32_8 : i32
    scf.if %12 {
      %c8_i32_24 = arith.constant 8 : i32
      %41 = arith.addi %0, %c8_i32_24 : i32
      %c15_i32 = arith.constant 15 : i32
      %42 = arith.minsi %41, %c15_i32 : i32
      %c0_25 = arith.constant 0 : index
      %43 = arith.index_cast %42 : i32 to index
      %c0_26 = arith.constant 0 : index
      %c0_27 = arith.constant 0 : index
      %44 = vector.load %arg3[%c0_25, %43, %c0_26, %c0_27] : memref<1x16x16x4xf32, #tpu.memory_space<vmem>>, vector<1x1x16x4xf32>
      %45 = vector.shape_cast %44 : vector<1x1x16x4xf32> to vector<1x16x4xf32>
      %c9 = arith.constant 9 : index
      %c1_28 = arith.constant 1 : index
      %c0_29 = arith.constant 0 : index
      %46 = vector.load %arg8[%c9, %c1_28, %c0_29] : memref<10x18x4xf32, #tpu.memory_space<vmem>>, vector<1x16x4xf32>
      tpu.vector_store %arg8[%c9, %c1_28, %c0_29], %45 {strides = array<i32>} : memref<10x18x4xf32, #tpu.memory_space<vmem>>, vector<1x16x4xf32>,
    } else {
    }
    %c0_9 = arith.constant 0 : index
    %c0_10 = arith.constant 0 : index
    %c0_11 = arith.constant 0 : index
    %13 = vector.load %arg8[%c0_9, %c0_10, %c0_11] : memref<10x18x4xf32, #tpu.memory_space<vmem>>, vector<10x18x4xf32>
    %14 = vector.extract_strided_slice %13 {offsets = [0, 0, 0], sizes = [8, 16, 4], strides = [1, 1, 1]} : vector<10x18x4xf32> to vector<8x16x4xf32>
    %15 = vector.extract_strided_slice %13 {offsets = [0, 1, 0], sizes = [8, 16, 4], strides = [1, 1, 1]} : vector<10x18x4xf32> to vector<8x16x4xf32>
    %16 = vector.extract_strided_slice %13 {offsets = [0, 2, 0], sizes = [8, 16, 4], strides = [1, 1, 1]} : vector<10x18x4xf32> to vector<8x16x4xf32>
    %17 = vector.extract_strided_slice %13 {offsets = [1, 0, 0], sizes = [8, 16, 4], strides = [1, 1, 1]} : vector<10x18x4xf32> to vector<8x16x4xf32>
    %18 = vector.extract_strided_slice %13 {offsets = [1, 1, 0], sizes = [8, 16, 4], strides = [1, 1, 1]} : vector<10x18x4xf32> to vector<8x16x4xf32>
    %19 = vector.extract_strided_slice %13 {offsets = [1, 2, 0], sizes = [8, 16, 4], strides = [1, 1, 1]} : vector<10x18x4xf32> to vector<8x16x4xf32>
    %20 = vector.extract_strided_slice %13 {offsets = [2, 0, 0], sizes = [8, 16, 4], strides = [1, 1, 1]} : vector<10x18x4xf32> to vector<8x16x4xf32>
    %21 = vector.extract_strided_slice %13 {offsets = [2, 1, 0], sizes = [8, 16, 4], strides = [1, 1, 1]} : vector<10x18x4xf32> to vector<8x16x4xf32>
    %22 = vector.extract_strided_slice %13 {offsets = [2, 2, 0], sizes = [8, 16, 4], strides = [1, 1, 1]} : vector<10x18x4xf32> to vector<8x16x4xf32>
    %23 = tpu.concatenate %14, %15, %16, %17, %18, %19, %20, %21, %22 in 2 : vector<8x16x4xf32>, vector<8x16x4xf32>, vector<8x16x4xf32>, vector<8x16x4xf32>, vector<8x16x4xf32>, vector<8x16x4xf32>, vector<8x16x4xf32>, vector<8x16x4xf32>, vector<8x16x4xf32> -> vector<8x16x36xf32>
    %24 = vector.shape_cast %23 : vector<8x16x36xf32> to vector<128x36xf32>
    %25 = arith.truncf %24 : vector<128x36xf32> to vector<128x36xbf16>
    %c0_12 = arith.constant 0 : index
    %c0_13 = arith.constant 0 : index
    %26 = vector.load %arg4[%c0_12, %c0_13] : memref<36x16xbf16, #tpu.memory_space<vmem>>, vector<36x16xbf16>
    %cst_14 = arith.constant dense<0.000000e+00> : vector<128x16xf32>
    %27 = tpu.matmul %25, %26, %cst_14 {dimension_numbers = #tpu.dot_dimension_numbers<[1], [0], [0], [1], [0, 0, 1, 1], [], []>} : vector<128x36xbf16>, vector<36x16xbf16>, vector<128x16xf32> -> vector<128x16xf32>
    %c0_15 = arith.constant 0 : index
    %c0_16 = arith.constant 0 : index
    %28 = vector.load %arg5[%c0_15, %c0_16] : memref<1x16xf32, #tpu.memory_space<vmem>>, vector<1x16xf32>
    %29 = vector.broadcast %28 : vector<1x16xf32> to vector<128x16xf32>
    %30 = arith.mulf %27, %29 : vector<128x16xf32>
    %c0_17 = arith.constant 0 : index
    %c0_18 = arith.constant 0 : index
    %31 = vector.load %arg6[%c0_17, %c0_18] : memref<1x16xf32, #tpu.memory_space<vmem>>, vector<1x16xf32>
    %32 = vector.broadcast %31 : vector<1x16xf32> to vector<128x16xf32>
    %33 = arith.addf %30, %32 : vector<128x16xf32>
    %cst_19 = arith.constant 0.000000e+00 : f32
    %34 = vector.broadcast %cst_19 : f32 to vector<128x16xf32>
    %35 = arith.maximumf %33, %34 : vector<128x16xf32>
    %36 = vector.shape_cast %35 : vector<128x16xf32> to vector<8x16x16xf32>
    %37 = arith.truncf %36 : vector<8x16x16xf32> to vector<8x16x16xbf16>
    %c0_20 = arith.constant 0 : index
    %c0_21 = arith.constant 0 : index
    %c0_22 = arith.constant 0 : index
    %c0_23 = arith.constant 0 : index
    %38 = vector.load %arg7[%c0_20, %c0_21, %c0_22, %c0_23] : memref<1x8x16x16xbf16, #tpu.memory_space<vmem>>, vector<1x8x16x16xbf16>
    %39 = vector.shape_cast %38 : vector<1x8x16x16xbf16> to vector<8x16x16xbf16>
    %40 = vector.shape_cast %37 : vector<8x16x16xbf16> to vector<1x8x16x16xbf16>
    tpu.vector_store %arg7[%c0_20, %c0_21, %c0_22, %c0_23], %40 {strides = array<i32>} : memref<1x8x16x16xbf16, #tpu.memory_space<vmem>>, vector<1x8x16x16xbf16>,
    return
  }
  func.func @transform_0(%arg0: i32, %arg1: i32, %arg2: i32) -> (i32, i32, i32, i32) {
    %c0_i32 = arith.constant 0 : i32
    %c0_i32_0 = arith.constant 0 : i32
    %c0_i32_1 = arith.constant 0 : i32
    %c0_i32_2 = arith.constant 0 : i32
    return %arg0, %c0_i32, %c0_i32_0, %c0_i32_1 : i32, i32, i32, i32
  }
  func.func @transform_1(%arg0: i32, %arg1: i32, %arg2: i32) -> (i32, i32) {
    %c0_i32 = arith.constant 0 : i32
    %c0_i32_0 = arith.constant 0 : i32
    return %c0_i32, %arg2 : i32, i32
  }
  func.func @transform_2(%arg0: i32, %arg1: i32, %arg2: i32) -> (i32, i32) {
    %c0_i32 = arith.constant 0 : i32
    %c0_i32_0 = arith.constant 0 : i32
    return %c0_i32, %arg2 : i32, i32
  }
  func.func @transform_3(%arg0: i32, %arg1: i32, %arg2: i32) -> (i32, i32) {
    %c0_i32 = arith.constant 0 : i32
    %c0_i32_0 = arith.constant 0 : i32
    return %c0_i32, %arg2 : i32, i32
  }
  func.func @transform_4(%arg0: i32, %arg1: i32, %arg2: i32) -> (i32, i32, i32, i32) {
    %c0_i32 = arith.constant 0 : i32
    %c0_i32_0 = arith.constant 0 : i32
    return %arg0, %arg1, %c0_i32, %arg2 : i32, i32, i32, i32
  }
}

module attributes {stable_mosaic.version = 11 : i64} {
  func.func @_conv_pool_kernel(%arg0: i32, %arg1: i32, %arg2: i32, %arg3: memref<1x16x16x16xbf16, #tpu.memory_space<vmem>>, %arg4: memref<144x16xbf16, #tpu.memory_space<vmem>>, %arg5: memref<1x16xf32, #tpu.memory_space<vmem>>, %arg6: memref<1x16xf32, #tpu.memory_space<vmem>>, %arg7: memref<32x128xbf16, #tpu.memory_space<vmem>>, %arg8: memref<1x4x8x16xf32, #tpu.memory_space<vmem>>, %arg9: memref<10x18x16xf32, #tpu.memory_space<vmem>>) attributes {dimension_semantics = [#tpu.dimension_semantics<parallel>, #tpu.dimension_semantics<parallel>, #tpu.dimension_semantics<parallel>], iteration_bounds = array<i64: 2, 2, 1>, scalar_prefetch = 0 : i64, scratch_operands = 1 : i64, tpu.core_type = #tpu.core_type<tc>, window_params = [{transform_indices = @transform_0, window_bounds = array<i64: 1, 16, 16, 16>}, {transform_indices = @transform_1, window_bounds = array<i64: 144, 16>}, {transform_indices = @transform_2, window_bounds = array<i64: 1, 16>}, {transform_indices = @transform_3, window_bounds = array<i64: 1, 16>}, {pipeline_mode = #tpu.pipeline_mode<synchronous>, transform_indices = @transform_4, window_bounds = array<i64: 32, 128>}, {transform_indices = @transform_5, window_bounds = array<i64: 1, 4, 8, 16>}]} {
    %c8_i32 = arith.constant 8 : i32
    %0 = arith.muli %arg1, %c8_i32 : i32
    %cst = arith.constant 0.000000e+00 : f32
    %1 = vector.broadcast %cst : f32 to vector<10x18x16xf32>
    %c0 = arith.constant 0 : index
    %c0_0 = arith.constant 0 : index
    %c0_1 = arith.constant 0 : index
    %2 = vector.load %arg9[%c0, %c0_0, %c0_1] : memref<10x18x16xf32, #tpu.memory_space<vmem>>, vector<10x18x16xf32>
    tpu.vector_store %arg9[%c0, %c0_0, %c0_1], %1 {strides = array<i32>} : memref<10x18x16xf32, #tpu.memory_space<vmem>>, vector<10x18x16xf32>,
    %c0_2 = arith.constant 0 : index
    %3 = arith.index_cast %0 : i32 to index
    %c0_3 = arith.constant 0 : index
    %c0_4 = arith.constant 0 : index
    %4 = vector.load %arg3[%c0_2, %3, %c0_3, %c0_4] : memref<1x16x16x16xbf16, #tpu.memory_space<vmem>>, vector<1x8x16x16xbf16>
    %5 = vector.shape_cast %4 : vector<1x8x16x16xbf16> to vector<8x16x16xbf16>
    %6 = arith.extf %5 : vector<8x16x16xbf16> to vector<8x16x16xf32>
    %c1 = arith.constant 1 : index
    %c1_5 = arith.constant 1 : index
    %c0_6 = arith.constant 0 : index
    %7 = vector.load %arg9[%c1, %c1_5, %c0_6] : memref<10x18x16xf32, #tpu.memory_space<vmem>>, vector<8x16x16xf32>
    tpu.vector_store %arg9[%c1, %c1_5, %c0_6], %6 {strides = array<i32>} : memref<10x18x16xf32, #tpu.memory_space<vmem>>, vector<8x16x16xf32>,
    %c0_i32 = arith.constant 0 : i32
    %8 = arith.cmpi sgt, %arg1, %c0_i32 : i32
    %9 = arith.extui %8 : i1 to i32
    %c0_i32_7 = arith.constant 0 : i32
    %10 = arith.cmpi ne, %9, %c0_i32_7 : i32
    scf.if %10 {
      %c1_i32_28 = arith.constant 1 : i32
      %46 = arith.subi %0, %c1_i32_28 : i32
      %c0_i32_29 = arith.constant 0 : i32
      %47 = arith.maxsi %46, %c0_i32_29 : i32
      %c0_30 = arith.constant 0 : index
      %48 = arith.index_cast %47 : i32 to index
      %c0_31 = arith.constant 0 : index
      %c0_32 = arith.constant 0 : index
      %49 = vector.load %arg3[%c0_30, %48, %c0_31, %c0_32] : memref<1x16x16x16xbf16, #tpu.memory_space<vmem>>, vector<1x1x16x16xbf16>
      %50 = vector.shape_cast %49 : vector<1x1x16x16xbf16> to vector<1x16x16xbf16>
      %51 = arith.extf %50 : vector<1x16x16xbf16> to vector<1x16x16xf32>
      %c0_33 = arith.constant 0 : index
      %c1_34 = arith.constant 1 : index
      %c0_35 = arith.constant 0 : index
      %52 = vector.load %arg9[%c0_33, %c1_34, %c0_35] : memref<10x18x16xf32, #tpu.memory_space<vmem>>, vector<1x16x16xf32>
      tpu.vector_store %arg9[%c0_33, %c1_34, %c0_35], %51 {strides = array<i32>} : memref<10x18x16xf32, #tpu.memory_space<vmem>>, vector<1x16x16xf32>,
    } else {
    }
    %c1_i32 = arith.constant 1 : i32
    %11 = arith.cmpi slt, %arg1, %c1_i32 : i32
    %12 = arith.extui %11 : i1 to i32
    %c0_i32_8 = arith.constant 0 : i32
    %13 = arith.cmpi ne, %12, %c0_i32_8 : i32
    scf.if %13 {
      %c8_i32_28 = arith.constant 8 : i32
      %46 = arith.addi %0, %c8_i32_28 : i32
      %c15_i32 = arith.constant 15 : i32
      %47 = arith.minsi %46, %c15_i32 : i32
      %c0_29 = arith.constant 0 : index
      %48 = arith.index_cast %47 : i32 to index
      %c0_30 = arith.constant 0 : index
      %c0_31 = arith.constant 0 : index
      %49 = vector.load %arg3[%c0_29, %48, %c0_30, %c0_31] : memref<1x16x16x16xbf16, #tpu.memory_space<vmem>>, vector<1x1x16x16xbf16>
      %50 = vector.shape_cast %49 : vector<1x1x16x16xbf16> to vector<1x16x16xbf16>
      %51 = arith.extf %50 : vector<1x16x16xbf16> to vector<1x16x16xf32>
      %c9 = arith.constant 9 : index
      %c1_32 = arith.constant 1 : index
      %c0_33 = arith.constant 0 : index
      %52 = vector.load %arg9[%c9, %c1_32, %c0_33] : memref<10x18x16xf32, #tpu.memory_space<vmem>>, vector<1x16x16xf32>
      tpu.vector_store %arg9[%c9, %c1_32, %c0_33], %51 {strides = array<i32>} : memref<10x18x16xf32, #tpu.memory_space<vmem>>, vector<1x16x16xf32>,
    } else {
    }
    %c0_9 = arith.constant 0 : index
    %c0_10 = arith.constant 0 : index
    %c0_11 = arith.constant 0 : index
    %14 = vector.load %arg9[%c0_9, %c0_10, %c0_11] : memref<10x18x16xf32, #tpu.memory_space<vmem>>, vector<10x18x16xf32>
    %15 = vector.extract_strided_slice %14 {offsets = [0, 0, 0], sizes = [8, 16, 16], strides = [1, 1, 1]} : vector<10x18x16xf32> to vector<8x16x16xf32>
    %16 = vector.extract_strided_slice %14 {offsets = [0, 1, 0], sizes = [8, 16, 16], strides = [1, 1, 1]} : vector<10x18x16xf32> to vector<8x16x16xf32>
    %17 = vector.extract_strided_slice %14 {offsets = [0, 2, 0], sizes = [8, 16, 16], strides = [1, 1, 1]} : vector<10x18x16xf32> to vector<8x16x16xf32>
    %18 = vector.extract_strided_slice %14 {offsets = [1, 0, 0], sizes = [8, 16, 16], strides = [1, 1, 1]} : vector<10x18x16xf32> to vector<8x16x16xf32>
    %19 = vector.extract_strided_slice %14 {offsets = [1, 1, 0], sizes = [8, 16, 16], strides = [1, 1, 1]} : vector<10x18x16xf32> to vector<8x16x16xf32>
    %20 = vector.extract_strided_slice %14 {offsets = [1, 2, 0], sizes = [8, 16, 16], strides = [1, 1, 1]} : vector<10x18x16xf32> to vector<8x16x16xf32>
    %21 = vector.extract_strided_slice %14 {offsets = [2, 0, 0], sizes = [8, 16, 16], strides = [1, 1, 1]} : vector<10x18x16xf32> to vector<8x16x16xf32>
    %22 = vector.extract_strided_slice %14 {offsets = [2, 1, 0], sizes = [8, 16, 16], strides = [1, 1, 1]} : vector<10x18x16xf32> to vector<8x16x16xf32>
    %23 = vector.extract_strided_slice %14 {offsets = [2, 2, 0], sizes = [8, 16, 16], strides = [1, 1, 1]} : vector<10x18x16xf32> to vector<8x16x16xf32>
    %24 = tpu.concatenate %15, %16, %17, %18, %19, %20, %21, %22, %23 in 2 : vector<8x16x16xf32>, vector<8x16x16xf32>, vector<8x16x16xf32>, vector<8x16x16xf32>, vector<8x16x16xf32>, vector<8x16x16xf32>, vector<8x16x16xf32>, vector<8x16x16xf32>, vector<8x16x16xf32> -> vector<8x16x144xf32>
    %25 = vector.shape_cast %24 : vector<8x16x144xf32> to vector<128x144xf32>
    %26 = arith.truncf %25 : vector<128x144xf32> to vector<128x144xbf16>
    %c0_12 = arith.constant 0 : index
    %c0_13 = arith.constant 0 : index
    %27 = vector.load %arg4[%c0_12, %c0_13] : memref<144x16xbf16, #tpu.memory_space<vmem>>, vector<144x16xbf16>
    %cst_14 = arith.constant dense<0.000000e+00> : vector<128x16xf32>
    %28 = tpu.matmul %26, %27, %cst_14 {dimension_numbers = #tpu.dot_dimension_numbers<[1], [0], [0], [1], [0, 0, 1, 1], [], []>} : vector<128x144xbf16>, vector<144x16xbf16>, vector<128x16xf32> -> vector<128x16xf32>
    %c0_15 = arith.constant 0 : index
    %c0_16 = arith.constant 0 : index
    %29 = vector.load %arg5[%c0_15, %c0_16] : memref<1x16xf32, #tpu.memory_space<vmem>>, vector<1x16xf32>
    %30 = vector.broadcast %29 : vector<1x16xf32> to vector<128x16xf32>
    %31 = arith.mulf %28, %30 : vector<128x16xf32>
    %c0_17 = arith.constant 0 : index
    %c0_18 = arith.constant 0 : index
    %32 = vector.load %arg6[%c0_17, %c0_18] : memref<1x16xf32, #tpu.memory_space<vmem>>, vector<1x16xf32>
    %33 = vector.broadcast %32 : vector<1x16xf32> to vector<128x16xf32>
    %34 = arith.addf %31, %33 : vector<128x16xf32>
    %cst_19 = arith.constant 0.000000e+00 : f32
    %35 = vector.broadcast %cst_19 : f32 to vector<128x16xf32>
    %36 = arith.maximumf %34, %35 : vector<128x16xf32>
    %c0_20 = arith.constant 0 : index
    %c0_21 = arith.constant 0 : index
    %37 = vector.load %arg7[%c0_20, %c0_21] : memref<32x128xbf16, #tpu.memory_space<vmem>>, vector<32x128xbf16>
    %38 = arith.truncf %36 : vector<128x16xf32> to vector<128x16xbf16>
    %cst_22 = arith.constant dense<0.000000e+00> : vector<32x16xf32>
    %39 = tpu.matmul %37, %38, %cst_22 {dimension_numbers = #tpu.dot_dimension_numbers<[1], [0], [0], [1], [0, 0, 1, 1], [], []>} : vector<32x128xbf16>, vector<128x16xbf16>, vector<32x16xf32> -> vector<32x16xf32>
    %cst_23 = arith.constant 2.500000e-01 : f32
    %40 = vector.broadcast %cst_23 : f32 to vector<32x16xf32>
    %41 = arith.mulf %39, %40 : vector<32x16xf32>
    %42 = vector.shape_cast %41 : vector<32x16xf32> to vector<4x8x16xf32>
    %c0_24 = arith.constant 0 : index
    %c0_25 = arith.constant 0 : index
    %c0_26 = arith.constant 0 : index
    %c0_27 = arith.constant 0 : index
    %43 = vector.load %arg8[%c0_24, %c0_25, %c0_26, %c0_27] : memref<1x4x8x16xf32, #tpu.memory_space<vmem>>, vector<1x4x8x16xf32>
    %44 = vector.shape_cast %43 : vector<1x4x8x16xf32> to vector<4x8x16xf32>
    %45 = vector.shape_cast %42 : vector<4x8x16xf32> to vector<1x4x8x16xf32>
    tpu.vector_store %arg8[%c0_24, %c0_25, %c0_26, %c0_27], %45 {strides = array<i32>} : memref<1x4x8x16xf32, #tpu.memory_space<vmem>>, vector<1x4x8x16xf32>,
    return
  }
  func.func @transform_0(%arg0: i32, %arg1: i32, %arg2: i32) -> (i32, i32, i32, i32) {
    %c0_i32 = arith.constant 0 : i32
    %c0_i32_0 = arith.constant 0 : i32
    %c0_i32_1 = arith.constant 0 : i32
    %c0_i32_2 = arith.constant 0 : i32
    return %arg0, %c0_i32, %c0_i32_0, %c0_i32_1 : i32, i32, i32, i32
  }
  func.func @transform_1(%arg0: i32, %arg1: i32, %arg2: i32) -> (i32, i32) {
    %c0_i32 = arith.constant 0 : i32
    %c0_i32_0 = arith.constant 0 : i32
    return %c0_i32, %arg2 : i32, i32
  }
  func.func @transform_2(%arg0: i32, %arg1: i32, %arg2: i32) -> (i32, i32) {
    %c0_i32 = arith.constant 0 : i32
    %c0_i32_0 = arith.constant 0 : i32
    return %c0_i32, %arg2 : i32, i32
  }
  func.func @transform_3(%arg0: i32, %arg1: i32, %arg2: i32) -> (i32, i32) {
    %c0_i32 = arith.constant 0 : i32
    %c0_i32_0 = arith.constant 0 : i32
    return %c0_i32, %arg2 : i32, i32
  }
  func.func @transform_4(%arg0: i32, %arg1: i32, %arg2: i32) -> (i32, i32) {
    %c0_i32 = arith.constant 0 : i32
    %c0_i32_0 = arith.constant 0 : i32
    %c0_i32_1 = arith.constant 0 : i32
    return %c0_i32, %c0_i32_0 : i32, i32
  }
  func.func @transform_5(%arg0: i32, %arg1: i32, %arg2: i32) -> (i32, i32, i32, i32) {
    %c0_i32 = arith.constant 0 : i32
    %c0_i32_0 = arith.constant 0 : i32
    return %arg0, %arg1, %c0_i32, %arg2 : i32, i32, i32, i32
  }
}

</mosaic_0001>

<llo_original>
// kernel: conv_block_forward.2
$region0: #{conv_block_forward.2}
  #allocation0 [shape = 'u32[]', space=smem, size = 0x4, offset = 0x4, fixed_abs, tag = 'smem constant byte address 0x4 - core index']
  #allocation1 [shape = 'u32[72,128]{1,0:T(1,128)}', space=vmem, size = 0x9000, scoped, tag = 'internal scratch']
  #allocation2 [shape = 'f32[10,18,4]{2,1,0:T(8,128)}', space=vmem, size = 0x1e000, scoped, tag = 'scratch operand']
  %s0 = inlined_call_operand.vmem [shape: f32[2,16,16,4], index: 0, kind: input, shape index: {}]
  %s1 = inlined_call_operand.vmem [shape: bf16[36,16], index: 1, kind: input, shape index: {}]
  %s2 = inlined_call_operand.vmem [shape: f32[1,16], index: 2, kind: input, shape index: {}]
  %s3 = inlined_call_operand.vmem [shape: f32[1,16], index: 3, kind: input, shape index: {}]
  %s4 = inlined_call_operand.vmem [shape: bf16[2,16,16,16], index: 4, kind: output, shape index: {}]
  %s5 = sld [smem:[#allocation0]]
  $region57: #{conv_block_forward.2} parent=0
    _
  %s7 = ssub.s32 1, %s5
  %s8 = scalar_select 0, %s7, %s5
  loop: start=0, step=1, limit=6
  $region2: #{conv_block_forward.2} parent=0 // loop_pre_header
    _
  $region3: #{conv_block_forward.2} parent=0 // loop_header
    %s10 = sphi 0, %s14
    %p11 = scmp.ge.s32.totalorder %s10, 6
    %s17 = sphi 0, %s36
    %s18 = sphi 0, %s32
    %s19 = sphi 0, %s28
    %s20 = sphi 0, %s17
    %s21 = sphi 0, %s18
    %s22 = sphi 0, %s19
    %s23 = sphi 0, %s20
    %s24 = sphi 0, %s21
    %s25 = sphi 0, %s22
    %s39 = sphi 0, %s41
    %s42 = sphi 0, %s39
    %s43 = sphi 0, %s42
    %s59 = sphi 0, %s43
    %s65 = sphi 0, %s67
    %s68 = sphi 0, %s65
    %s69 = sphi 0, %s68
    %s85 = sphi 0, %s69
    %s91 = sphi 0, %s93
    %s94 = sphi 0, %s91
    %s95 = sphi 0, %s94
    %s111 = sphi 0, %s95
    %s117 = sphi 0, %s119
    %s120 = sphi 0, %s117
    %s121 = sphi 0, %s120
    %s137 = sphi 0, %s121
    %s147 = sphi 0, %s149
    %s150 = sphi 0, %s147
    %s151 = sphi 0, %s150
    %s167 = sphi 0, %s151
  $region4: #{conv_block_forward.2} parent=0 // loop_header_branch
    %13 = sbr.rel (%p11) target = $region8
  $region5: #{conv_block_forward.2} parent=0 // loop_body
    %s15 = ssub.s32 %s10, 1
    %s16 = ssub.s32 %s10, 2
    %s26 = sadd.s32 1, %s19
    %p27 = scmp.ge.s32.totalorder %s26, 1
    %s28 = scalar_select %p27, 0, %s26
    %s29 = sadd.s32 1, %s18
    %s30 = scalar_select %p27, %s29, %s18
    %p31 = scmp.ge.s32.totalorder %s30, 2
    %s32 = scalar_select %p31, 0, %s30
    %s33 = sadd.s32 1, %s17
    %s34 = scalar_select %p31, %s33, %s17
    %p35 = scmp.ge.s32.totalorder %s34, 2
    %s36 = scalar_select %p35, 0, %s34
    %s37 = ssub.s32 %s17, %s36
    %p38 = scmp.eq.s32.totalorder %s37, 0
    %s40 = sadd.s32 %s39, 1
    %s41 = scalar_select %p38, %s39, %s40
    %p44 = pneg %p38
    %p45 = scmp.eq.s32.totalorder %s10, 3
    %p46 = por %p44, %p45
    %p47 = scmp.ne.s32.totalorder %s39, %s42
    %p48 = scmp.eq.s32.totalorder %s10, 0
    %p49 = por %p47, %p48
    %p50 = scmp.ne.s32.totalorder %s39, %s42
    %p51 = scmp.eq.s32.totalorder %s15, 3
    %p52 = por %p50, %p51
    %p53 = scmp.ne.s32.totalorder %s42, %s43
    %p54 = scmp.eq.s32.totalorder %s15, 0
    %p55 = por %p53, %p54
    %p56 = scmp.ne.s32.totalorder %s42, %s43
    %p57 = scmp.eq.s32.totalorder %s16, 3
    %p58 = por %p56, %p57
    %p60 = scmp.ne.s32.totalorder %s43, %s59
    %p61 = scmp.eq.s32.totalorder %s16, 0
    %p62 = por %p60, %p61
    %s63 = ssub.s32 %s19, %s28
    %p64 = scmp.eq.s32.totalorder %s63, 0
    %s66 = sadd.s32 %s65, 1
    %s67 = scalar_select %p64, %s65, %s66
    %p70 = pneg %p64
    %p71 = scmp.eq.s32.totalorder %s10, 3
    %p72 = por %p70, %p71
    %p73 = scmp.ne.s32.totalorder %s65, %s68
    %p74 = scmp.eq.s32.totalorder %s10, 0
    %p75 = por %p73, %p74
    %p76 = scmp.ne.s32.totalorder %s65, %s68
    %p77 = scmp.eq.s32.totalorder %s15, 3
    %p78 = por %p76, %p77
    %p79 = scmp.ne.s32.totalorder %s68, %s69
    %p80 = scmp.eq.s32.totalorder %s15, 0
    %p81 = por %p79, %p80
    %p82 = scmp.ne.s32.totalorder %s68, %s69
    %p83 = scmp.eq.s32.totalorder %s16, 3
    %p84 = por %p82, %p83
    %p86 = scmp.ne.s32.totalorder %s69, %s85
    %p87 = scmp.eq.s32.totalorder %s16, 0
    %p88 = por %p86, %p87
    %s89 = ssub.s32 %s19, %s28
    %p90 = scmp.eq.s32.totalorder %s89, 0
    %s92 = sadd.s32 %s91, 1
    %s93 = scalar_select %p90, %s91, %s92
    %p96 = pneg %p90
    %p97 = scmp.eq.s32.totalorder %s10, 3
    %p98 = por %p96, %p97
    %p99 = scmp.ne.s32.totalorder %s91, %s94
    %p100 = scmp.eq.s32.totalorder %s10, 0
    %p101 = por %p99, %p100
    %p102 = scmp.ne.s32.totalorder %s91, %s94
    %p103 = scmp.eq.s32.totalorder %s15, 3
    %p104 = por %p102, %p103
    %p105 = scmp.ne.s32.totalorder %s94, %s95
    %p106 = scmp.eq.s32.totalorder %s15, 0
    %p107 = por %p105, %p106
    %p108 = scmp.ne.s32.totalorder %s94, %s95
    %p109 = scmp.eq.s32.totalorder %s16, 3
    %p110 = por %p108, %p109
    %p112 = scmp.ne.s32.totalorder %s95, %s111
    %p113 = scmp.eq.s32.totalorder %s16, 0
    %p114 = por %p112, %p113
    %s115 = ssub.s32 %s19, %s28
    %p116 = scmp.eq.s32.totalorder %s115, 0
    %s118 = sadd.s32 %s117, 1
    %s119 = scalar_select %p116, %s117, %s118
    %p122 = pneg %p116
    %p123 = scmp.eq.s32.totalorder %s10, 3
    %p124 = por %p122, %p123
    %p125 = scmp.ne.s32.totalorder %s117, %s120
    %p126 = scmp.eq.s32.totalorder %s10, 0
    %p127 = por %p125, %p126
    %p128 = scmp.ne.s32.totalorder %s117, %s120
    %p129 = scmp.eq.s32.totalorder %s15, 3
    %p130 = por %p128, %p129
    %p131 = scmp.ne.s32.totalorder %s120, %s121
    %p132 = scmp.eq.s32.totalorder %s15, 0
    %p133 = por %p131, %p132
    %p134 = scmp.ne.s32.totalorder %s120, %s121
    %p135 = scmp.eq.s32.totalorder %s16, 3
    %p136 = por %p134, %p135
    %p138 = scmp.ne.s32.totalorder %s121, %s137
    %p139 = scmp.eq.s32.totalorder %s16, 0
    %p140 = por %p138, %p139
    %s141 = ssub.s32 %s17, %s36
    %s142 = ssub.s32 %s18, %s32
    %s143 = sor.u32 %s141, %s142
    %s144 = ssub.s32 %s19, %s28
    %s145 = sor.u32 %s143, %s144
    %p146 = scmp.eq.s32.totalorder %s145, 0
    %s148 = sadd.s32 %s147, 1
    %s149 = scalar_select %p146, %s147, %s148
    %p152 = pneg %p146
    %p153 = scmp.eq.s32.totalorder %s10, 3
    %p154 = por %p152, %p153
    %p155 = scmp.ne.s32.totalorder %s147, %s150
    %p156 = scmp.eq.s32.totalorder %s10, 0
    %p157 = por %p155, %p156
    %p158 = scmp.ne.s32.totalorder %s147, %s150
    %p159 = scmp.eq.s32.totalorder %s15, 3
    %p160 = por %p158, %p159
    %p161 = scmp.ne.s32.totalorder %s150, %s151
    %p162 = scmp.eq.s32.totalorder %s15, 0
    %p163 = por %p161, %p162
    %p164 = scmp.ne.s32.totalorder %s150, %s151
    %p165 = scmp.eq.s32.totalorder %s16, 3
    %p166 = por %p164, %p165
    %p168 = scmp.ne.s32.totalorder %s151, %s167
    %p169 = scmp.eq.s32.totalorder %s16, 0
    %p170 = por %p168, %p169
    %p171 = scmp.le.s32.totalorder 1, %s10
    %p172 = scmp.lt.s32.totalorder %s10, 5
    %p173 = pnand %p171, %p172
    %p174 = pneg %p173
    // Predicated region
    $region9: #{conv_block_forward.2} parent=5 // pred_check
      _
    $region10: #{conv_block_forward.2} parent=5 // pred_check_branch
      %176 = sbr.rel (%p173) target = $region12
    $region11: #{conv_block_forward.2} parent=5 // pred_region
      %s177 = ssub.s32 %s10, 1
      // Predicated region
      $region13: #{conv_block_forward.2} parent=11 // pred_check
        %p178 = pneg %p81
      $region14: #{conv_block_forward.2} parent=11 // pred_check_branch
        %180 = sbr.rel (%p178) target = $region16
      $region15: #{conv_block_forward.2} parent=11 // pred_region
        %p181 = scmp.lt.s32.totalorder %s22, 0
        %s182 = scalar_select %p181, %s22, 0
        %s183 = smul.addr %s182, 4
        %s184 = scalar_lea.vmem %s1, %s183
      $region16: #{conv_block_forward.2} parent=11 // pred_fallthru
        _
      // Predicated region
      $region17: #{conv_block_forward.2} parent=11 // pred_check
        %p185 = pneg %p107
      $region18: #{conv_block_forward.2} parent=11 // pred_check_branch
        %187 = sbr.rel (%p185) target = $region20
      $region19: #{conv_block_forward.2} parent=11 // pred_region
        %p188 = scmp.lt.s32.totalorder %s22, 0
        %s189 = scalar_select %p188, %s22, 0
        %s190 = scalar_lea.vmem %s2, %s189
      $region20: #{conv_block_forward.2} parent=11 // pred_fallthru
        _
      // Predicated region
      $region21: #{conv_block_forward.2} parent=11 // pred_check
        %p191 = pneg %p133
      $region22: #{conv_block_forward.2} parent=11 // pred_check_branch
        %193 = sbr.rel (%p191) target = $region24
      $region23: #{conv_block_forward.2} parent=11 // pred_region
        %p194 = scmp.lt.s32.totalorder %s22, 0
        %s195 = scalar_select %p194, %s22, 0
        %s196 = scalar_lea.vmem %s3, %s195
      $region24: #{conv_block_forward.2} parent=11 // pred_fallthru
        _
    $region12: #{conv_block_forward.2} parent=5 // pred_fallthru
      _
    %p197 = scmp.lt.s32.totalorder %s10, 4
    // Predicated region
    $region25: #{conv_block_forward.2} parent=5 // pred_check
      %p198 = pneg %p197
    $region26: #{conv_block_forward.2} parent=5 // pred_check_branch
      %200 = sbr.rel (%p198) target = $region28
    $region27: #{conv_block_forward.2} parent=5 // pred_region
      // Predicated region
      $region29: #{conv_block_forward.2} parent=27 // pred_check
        %p201 = pneg %p49
      $region30: #{conv_block_forward.2} parent=27 // pred_check_branch
        %203 = sbr.rel (%p201) target = $region32
      $region31: #{conv_block_forward.2} parent=27 // pred_region
        %p204 = scmp.lt.s32.totalorder %s17, 1
        %s205 = scalar_select %p204, %s17, 1
        %s206 = smul.addr %s205, 32
        %s207 = smul.addr %s206, 8
        %s208 = scalar_lea.vmem %s0, %s207
      $region32: #{conv_block_forward.2} parent=27 // pred_fallthru
        _
    $region28: #{conv_block_forward.2} parent=5 // pred_fallthru
      _
    %p209 = scmp.le.s32.totalorder 1, %s10
    %p210 = scmp.lt.s32.totalorder %s10, 5
    %p211 = pnand %p209, %p210
    %p212 = pneg %p211
    // Predicated region
    $region33: #{conv_block_forward.2} parent=5 // pred_check
      _
    $region34: #{conv_block_forward.2} parent=5 // pred_check_branch
      %214 = sbr.rel (%p211) target = $region36
    $region35: #{conv_block_forward.2} parent=5 // pred_region
      %s215 = ssub.s32 %s10, 1
      %p216 = scmp.lt.s32.totalorder %s20, 1
      %s217 = scalar_select %p216, %s20, 1
      %s218 = smul.addr %s217, 32
      %s219 = smul.addr %s218, 8
      %s220 = scalar_lea.vmem %s0, %s219
      %p221 = pneg %p55
      %p222 = pneg %p52
      %p223 = scmp.lt.s32.totalorder %s22, 0
      %s224 = scalar_select %p223, %s22, 0
      %s225 = smul.addr %s224, 4
      %s226 = scalar_lea.vmem %s1, %s225
      %p227 = pneg %p81
      %p228 = pneg %p78
      %p229 = scmp.lt.s32.totalorder %s22, 0
      %s230 = scalar_select %p229, %s22, 0
      %s231 = scalar_lea.vmem %s2, %s230
      %p232 = pneg %p107
      %p233 = pneg %p104
      %p234 = scmp.lt.s32.totalorder %s22, 0
      %s235 = scalar_select %p234, %s22, 0
      %s236 = scalar_lea.vmem %s3, %s235
      %p237 = pneg %p133
      %p238 = pneg %p130
      %p239 = pneg %p163
      %p240 = pneg %p160
      %s241 = smul.u32 8, %s21
      %p242 = scmp.lt.s32.totalorder %s20, 1
      %s243 = scalar_select %p242, %s20, 1
      %p244 = scmp.lt.s32.totalorder %s241, 15
      %s245 = scalar_select %p244, %s241, 15
      %p246 = scmp.lt.s32.totalorder %s22, 0
      %s247 = scalar_select %p246, %s22, 0
      %s248 = smul.addr %s245, 2
      %s249 = sadd.s32 %s247, %s248
      %s250 = smul.addr %s243, 32
      %s251 = sadd.s32 %s249, %s250
      %s252 = smul.addr %s251, 4
      %s253 = scalar_lea.vmem %s4, %s252
      %p254 = scmp.lt.s32.totalorder %s20, 1
      %s255 = scalar_select %p254, %s20, 1
      %s256 = smul.addr %s255, 32
      %s257 = smul.addr %s256, 8
      %s258 = scalar_lea.vmem %s0, %s257
      %p259 = scmp.lt.s32.totalorder %s22, 0
      %s260 = scalar_select %p259, %s22, 0
      %s261 = smul.addr %s260, 4
      %s262 = scalar_lea.vmem %s1, %s261
      %p263 = scmp.lt.s32.totalorder %s22, 0
      %s264 = scalar_select %p263, %s22, 0
      %s265 = scalar_lea.vmem %s2, %s264
      %p266 = scmp.lt.s32.totalorder %s22, 0
      %s267 = scalar_select %p266, %s22, 0
      %s268 = scalar_lea.vmem %s3, %s267
      %s269 = smul.u32 8, %s21
      %p270 = scmp.lt.s32.totalorder %s20, 1
      %s271 = scalar_select %p270, %s20, 1
      %p272 = scmp.lt.s32.totalorder %s269, 15
      %s273 = scalar_select %p272, %s269, 15
      %p274 = scmp.lt.s32.totalorder %s22, 0
      %s275 = scalar_select %p274, %s22, 0
      %s276 = smul.addr %s273, 2
      %s277 = sadd.s32 %s275, %s276
      %s278 = smul.addr %s271, 32
      %s279 = sadd.s32 %s277, %s278
      %s280 = smul.addr %s279, 4
      %s281 = scalar_lea.vmem %s4, %s280
      %s282 = smul.u32 8, %s21
      %s284 = smul.u32 %s21, 8
      %vm285 = vcmask 31744
      %286 = vst.msk [vmem:[#allocation2] sm:$0xff] %vm285, 0.0
      %287 = vst.msk [vmem:[#allocation2 + $0x8] sm:$0xff] %vm285, 0.0
      %vm288 = vcmask 25600
      %289 = vst.msk [vmem:[#allocation2 + $0x10] sm:$0x3] %vm288, 0.0
      %290 = vst.msk [vmem:[#allocation2 + $0x18] sm:$0xff] %vm285, 0.0
      %291 = vst.msk [vmem:[#allocation2 + $0x20] sm:$0xff] %vm285, 0.0
      %292 = vst.msk [vmem:[#allocation2 + $0x28] sm:$0x3] %vm288, 0.0
      %293 = vst.msk [vmem:[#allocation2 + $0x30] sm:$0xff] %vm285, 0.0
      %294 = vst.msk [vmem:[#allocation2 + $0x38] sm:$0xff] %vm285, 0.0
      %295 = vst.msk [vmem:[#allocation2 + $0x40] sm:$0x3] %vm288, 0.0
      %296 = vst.msk [vmem:[#allocation2 + $0x48] sm:$0xff] %vm285, 0.0
      %297 = vst.msk [vmem:[#allocation2 + $0x50] sm:$0xff] %vm285, 0.0
      %298 = vst.msk [vmem:[#allocation2 + $0x58] sm:$0x3] %vm288, 0.0
      %299 = vst.msk [vmem:[#allocation2 + $0x60] sm:$0xff] %vm285, 0.0
      %300 = vst.msk [vmem:[#allocation2 + $0x68] sm:$0xff] %vm285, 0.0
      %301 = vst.msk [vmem:[#allocation2 + $0x70] sm:$0x3] %vm288, 0.0
      %302 = vst.msk [vmem:[#allocation2 + $0x78] sm:$0xff] %vm285, 0.0
      %303 = vst.msk [vmem:[#allocation2 + $0x80] sm:$0xff] %vm285, 0.0
      %304 = vst.msk [vmem:[#allocation2 + $0x88] sm:$0x3] %vm288, 0.0
      %305 = vst.msk [vmem:[#allocation2 + $0x90] sm:$0xff] %vm285, 0.0
      %306 = vst.msk [vmem:[#allocation2 + $0x98] sm:$0xff] %vm285, 0.0
      %307 = vst.msk [vmem:[#allocation2 + $0xa0] sm:$0x3] %vm288, 0.0
      %308 = vst.msk [vmem:[#allocation2 + $0xa8] sm:$0xff] %vm285, 0.0
      %309 = vst.msk [vmem:[#allocation2 + $0xb0] sm:$0xff] %vm285, 0.0
      %310 = vst.msk [vmem:[#allocation2 + $0xb8] sm:$0x3] %vm288, 0.0
      %311 = vst.msk [vmem:[#allocation2 + $0xc0] sm:$0xff] %vm285, 0.0
      %312 = vst.msk [vmem:[#allocation2 + $0xc8] sm:$0xff] %vm285, 0.0
      %313 = vst.msk [vmem:[#allocation2 + $0xd0] sm:$0x3] %vm288, 0.0
      %314 = vst.msk [vmem:[#allocation2 + $0xd8] sm:$0xff] %vm285, 0.0
      %315 = vst.msk [vmem:[#allocation2 + $0xe0] sm:$0xff] %vm285, 0.0
      %316 = vst.msk [vmem:[#allocation2 + $0xe8] sm:$0x3] %vm288, 0.0
      %s317 = smul.u32 %s284, 16
      %s318 = scalar_lea.vmem %s258, %s317
      %v319 = vld [vmem:[%s318] sm:$0xff]
      %v320 = vld [vmem:[%s318 + $0x8] sm:$0xff]
      %v321 = vld [vmem:[%s318 + $0x10] sm:$0xff]
      %v322 = vld [vmem:[%s318 + $0x18] sm:$0xff]
      %v323 = vld [vmem:[%s318 + $0x20] sm:$0xff]
      %v324 = vld [vmem:[%s318 + $0x28] sm:$0xff]
      %v325 = vld [vmem:[%s318 + $0x30] sm:$0xff]
      %v326 = vld [vmem:[%s318 + $0x38] sm:$0xff]
      %v327 = vld [vmem:[%s318 + $0x40] sm:$0xff]
      %v328 = vld [vmem:[%s318 + $0x48] sm:$0xff]
      %v329 = vld [vmem:[%s318 + $0x50] sm:$0xff]
      %v330 = vld [vmem:[%s318 + $0x58] sm:$0xff]
      %v331 = vld [vmem:[%s318 + $0x60] sm:$0xff]
      %v332 = vld [vmem:[%s318 + $0x68] sm:$0xff]
      %v333 = vld [vmem:[%s318 + $0x70] sm:$0xff]
      %v334 = vld [vmem:[%s318 + $0x78] sm:$0xff]
      %s335 = scalar_lea.vmem [#allocation2], 24
      %336 = vst.msk [vmem:[%s335 + $0x1] sm:$0xff] %vm285, %v319
      %337 = vst.msk [vmem:[%s335 + $0x9] sm:$0xff] %vm285, %v320
      %338 = vst.msk [vmem:[%s335 + $0x19] sm:$0xff] %vm285, %v321
      %339 = vst.msk [vmem:[%s335 + $0x21] sm:$0xff] %vm285, %v322
      %340 = vst.msk [vmem:[%s335 + $0x31] sm:$0xff] %vm285, %v323
      %341 = vst.msk [vmem:[%s335 + $0x39] sm:$0xff] %vm285, %v324
      %342 = vst.msk [vmem:[%s335 + $0x49] sm:$0xff] %vm285, %v325
      %343 = vst.msk [vmem:[%s335 + $0x51] sm:$0xff] %vm285, %v326
      %344 = vst.msk [vmem:[%s335 + $0x61] sm:$0xff] %vm285, %v327
      %345 = vst.msk [vmem:[%s335 + $0x69] sm:$0xff] %vm285, %v328
      %346 = vst.msk [vmem:[%s335 + $0x79] sm:$0xff] %vm285, %v329
      %347 = vst.msk [vmem:[%s335 + $0x81] sm:$0xff] %vm285, %v330
      %348 = vst.msk [vmem:[%s335 + $0x91] sm:$0xff] %vm285, %v331
      %349 = vst.msk [vmem:[%s335 + $0x99] sm:$0xff] %vm285, %v332
      %350 = vst.msk [vmem:[%s335 + $0xa9] sm:$0xff] %vm285, %v333
      %351 = vst.msk [vmem:[%s335 + $0xb1] sm:$0xff] %vm285, %v334
      %p352 = scmp.gt.s32.totalorder %s21, 0
      // Predicated region
      $region37: #{conv_block_forward.2} parent=35 // pred_check
        %p353 = pneg %p352
      $region38: #{conv_block_forward.2} parent=35 // pred_check_branch
        %355 = sbr.rel (%p353) target = $region40
      $region39: #{conv_block_forward.2} parent=35 // pred_region
        %s356 = ssub.s32 %s284, 1
        %p357 = scmp.gt.s32.totalorder %s356, 0
        %s358 = scalar_select %p357, %s356, 0
        %s359 = smul.u32 %s358, 16
        %s360 = scalar_lea.vmem %s258, %s359
        %v361 = vld [vmem:[%s360] sm:$0xff]
        %v362 = vld [vmem:[%s360 + $0x8] sm:$0xff]
        %363 = vst.msk [vmem:[#allocation2 + $0x1] sm:$0xff] %vm285, %v361
        %364 = vst.msk [vmem:[#allocation2 + $0x9] sm:$0xff] %vm285, %v362
      $region40: #{conv_block_forward.2} parent=35 // pred_fallthru
        _
      %p365 = scmp.lt.s32.totalorder %s21, 1
      // Predicated region
      $region41: #{conv_block_forward.2} parent=35 // pred_check
        %p366 = pneg %p365
      $region42: #{conv_block_forward.2} parent=35 // pred_check_branch
        %368 = sbr.rel (%p366) target = $region44
      $region43: #{conv_block_forward.2} parent=35 // pred_region
        %s369 = sadd.s32 %s284, 8
        %p370 = scmp.lt.s32.totalorder %s369, 15
        %s371 = scalar_select %p370, %s369, 15
        %s372 = smul.u32 %s371, 16
        %s373 = scalar_lea.vmem %s258, %s372
        %v374 = vld [vmem:[%s373] sm:$0xff]
        %v375 = vld [vmem:[%s373 + $0x8] sm:$0xff]
        %s376 = scalar_lea.vmem [#allocation2], 216
        %377 = vst.msk [vmem:[%s376 + $0x1] sm:$0xff] %vm285, %v374
        %378 = vst.msk [vmem:[%s376 + $0x9] sm:$0xff] %vm285, %v375
      $region44: #{conv_block_forward.2} parent=35 // pred_fallthru
        _
      %v379 = vld [vmem:[#allocation2] sm:$0xff]
      %v380 = vld [vmem:[#allocation2 + $0x8] sm:$0xff]
      %v381 = vld [vmem:[#allocation2 + $0x10] sm:$0x3]
      %v382 = vld [vmem:[#allocation2 + $0x18] sm:$0xff]
      %v383 = vld [vmem:[#allocation2 + $0x20] sm:$0xff]
      %v384 = vld [vmem:[#allocation2 + $0x28] sm:$0x3]
      %v385 = vld [vmem:[#allocation2 + $0x30] sm:$0xff]
      %v386 = vld [vmem:[#allocation2 + $0x38] sm:$0xff]
      %v387 = vld [vmem:[#allocation2 + $0x40] sm:$0x3]
      %v388 = vld [vmem:[#allocation2 + $0x48] sm:$0xff]
      %v389 = vld [vmem:[#allocation2 + $0x50] sm:$0xff]
      %v390 = vld [vmem:[#allocation2 + $0x58] sm:$0x3]
      %v391 = vld [vmem:[#allocation2 + $0x60] sm:$0xff]
      %v392 = vld [vmem:[#allocation2 + $0x68] sm:$0xff]
      %v393 = vld [vmem:[#allocation2 + $0x70] sm:$0x3]
      %v394 = vld [vmem:[#allocation2 + $0x78] sm:$0xff]
      %v395 = vld [vmem:[#allocation2 + $0x80] sm:$0xff]
      %v396 = vld [vmem:[#allocation2 + $0x88] sm:$0x3]
      %v397 = vld [vmem:[#allocation2 + $0x90] sm:$0xff]
      %v398 = vld [vmem:[#allocation2 + $0x98] sm:$0xff]
      %v399 = vld [vmem:[#allocation2 + $0xa0] sm:$0x3]
      %v400 = vld [vmem:[#allocation2 + $0xa8] sm:$0xff]
      %v401 = vld [vmem:[#allocation2 + $0xb0] sm:$0xff]
      %v402 = vld [vmem:[#allocation2 + $0xb8] sm:$0x3]
      %v403 = vld [vmem:[#allocation2 + $0xc0] sm:$0xff]
      %v404 = vld [vmem:[#allocation2 + $0xc8] sm:$0xff]
      %v405 = vld [vmem:[#allocation2 + $0xd0] sm:$0x3]
      %v406 = vld [vmem:[#allocation2 + $0xd8] sm:$0xff]
      %v407 = vld [vmem:[#allocation2 + $0xe0] sm:$0xff]
      %v408 = vld [vmem:[#allocation2 + $0xe8] sm:$0x3]
      %vm433 = vcmask 1046528
      %v434 = vrot.slane %v379, 1
      %v435 = vrot.slane %v380, 1
      %v436 = vsel %vm433, %v434, %v435
      %v437 = vrot.slane %v381, 1
      %v438 = vsel %vm433, %v435, %v437
      %v439 = vrot.slane %v382, 1
      %v440 = vrot.slane %v383, 1
      %v441 = vsel %vm433, %v439, %v440
      %v442 = vrot.slane %v384, 1
      %v443 = vsel %vm433, %v440, %v442
      %v444 = vrot.slane %v385, 1
      %v445 = vrot.slane %v386, 1
      %v446 = vsel %vm433, %v444, %v445
      %v447 = vrot.slane %v387, 1
      %v448 = vsel %vm433, %v445, %v447
      %v449 = vrot.slane %v388, 1
      %v450 = vrot.slane %v389, 1
      %v451 = vsel %vm433, %v449, %v450
      %v452 = vrot.slane %v390, 1
      %v453 = vsel %vm433, %v450, %v452
      %v454 = vrot.slane %v391, 1
      %v455 = vrot.slane %v392, 1
      %v456 = vsel %vm433, %v454, %v455
      %v457 = vrot.slane %v393, 1
      %v458 = vsel %vm433, %v455, %v457
      %v459 = vrot.slane %v394, 1
      %v460 = vrot.slane %v395, 1
      %v461 = vsel %vm433, %v459, %v460
      %v462 = vrot.slane %v396, 1
      %v463 = vsel %vm433, %v460, %v462
      %v464 = vrot.slane %v397, 1
      %v465 = vrot.slane %v398, 1
      %v466 = vsel %vm433, %v464, %v465
      %v467 = vrot.slane %v399, 1
      %v468 = vsel %vm433, %v465, %v467
      %v469 = vrot.slane %v400, 1
      %v470 = vrot.slane %v401, 1
      %v471 = vsel %vm433, %v469, %v470
      %v472 = vrot.slane %v402, 1
      %v473 = vsel %vm433, %v470, %v472
      %474 = vrot.lane.b32.xlu0 %v436, 4
      %v475 = vpop.permute.xlu0 %474
      %476 = vrot.lane.b32.xlu0 %v438, 4
      %v477 = vpop.permute.xlu0 %476
      %478 = vrot.lane.b32.xlu0 %v441, 4
      %v479 = vpop.permute.xlu0 %478
      %480 = vrot.lane.b32.xlu0 %v443, 4
      %v481 = vpop.permute.xlu0 %480
      %482 = vrot.lane.b32.xlu0 %v446, 4
      %v483 = vpop.permute.xlu0 %482
      %484 = vrot.lane.b32.xlu0 %v448, 4
      %v485 = vpop.permute.xlu0 %484
      %486 = vrot.lane.b32.xlu0 %v451, 4
      %v487 = vpop.permute.xlu0 %486
      %488 = vrot.lane.b32.xlu0 %v453, 4
      %v489 = vpop.permute.xlu0 %488
      %490 = vrot.lane.b32.xlu0 %v456, 4
      %v491 = vpop.permute.xlu0 %490
      %492 = vrot.lane.b32.xlu0 %v458, 4
      %v493 = vpop.permute.xlu0 %492
      %494 = vrot.lane.b32.xlu0 %v461, 4
      %v495 = vpop.permute.xlu0 %494
      %496 = vrot.lane.b32.xlu0 %v463, 4
      %v497 = vpop.permute.xlu0 %496
      %498 = vrot.lane.b32.xlu0 %v466, 4
      %v499 = vpop.permute.xlu0 %498
      %500 = vrot.lane.b32.xlu0 %v468, 4
      %v501 = vpop.permute.xlu0 %500
      %502 = vrot.lane.b32.xlu0 %v471, 4
      %v503 = vpop.permute.xlu0 %502
      %504 = vrot.lane.b32.xlu0 %v473, 4
      %v505 = vpop.permute.xlu0 %504
      %vm522 = vcmask 1045504
      %v523 = vrot.slane %v379, 2
      %v524 = vrot.slane %v380, 2
      %v525 = vsel %vm522, %v523, %v524
      %v526 = vrot.slane %v381, 2
      %v527 = vsel %vm522, %v524, %v526
      %v528 = vrot.slane %v382, 2
      %v529 = vrot.slane %v383, 2
      %v530 = vsel %vm522, %v528, %v529
      %v531 = vrot.slane %v384, 2
      %v532 = vsel %vm522, %v529, %v531
      %v533 = vrot.slane %v385, 2
      %v534 = vrot.slane %v386, 2
      %v535 = vsel %vm522, %v533, %v534
      %v536 = vrot.slane %v387, 2
      %v537 = vsel %vm522, %v534, %v536
      %v538 = vrot.slane %v388, 2
      %v539 = vrot.slane %v389, 2
      %v540 = vsel %vm522, %v538, %v539
      %v541 = vrot.slane %v390, 2
      %v542 = vsel %vm522, %v539, %v541
      %v543 = vrot.slane %v391, 2
      %v544 = vrot.slane %v392, 2
      %v545 = vsel %vm522, %v543, %v544
      %v546 = vrot.slane %v393, 2
      %v547 = vsel %vm522, %v544, %v546
      %v548 = vrot.slane %v394, 2
      %v549 = vrot.slane %v395, 2
      %v550 = vsel %vm522, %v548, %v549
      %v551 = vrot.slane %v396, 2
      %v552 = vsel %vm522, %v549, %v551
      %v553 = vrot.slane %v397, 2
      %v554 = vrot.slane %v398, 2
      %v555 = vsel %vm522, %v553, %v554
      %v556 = vrot.slane %v399, 2
      %v557 = vsel %vm522, %v554, %v556
      %v558 = vrot.slane %v400, 2
      %v559 = vrot.slane %v401, 2
      %v560 = vsel %vm522, %v558, %v559
      %v561 = vrot.slane %v402, 2
      %v562 = vsel %vm522, %v559, %v561
      %563 = vrot.lane.b32.xlu0 %v525, 8
      %v564 = vpop.permute.xlu0 %563
      %565 = vrot.lane.b32.xlu0 %v527, 8
      %v566 = vpop.permute.xlu0 %565
      %567 = vrot.lane.b32.xlu0 %v530, 8
      %v568 = vpop.permute.xlu0 %567
      %569 = vrot.lane.b32.xlu0 %v532, 8
      %v570 = vpop.permute.xlu0 %569
      %571 = vrot.lane.b32.xlu0 %v535, 8
      %v572 = vpop.permute.xlu0 %571
      %573 = vrot.lane.b32.xlu0 %v537, 8
      %v574 = vpop.permute.xlu0 %573
      %575 = vrot.lane.b32.xlu0 %v540, 8
      %v576 = vpop.permute.xlu0 %575
      %577 = vrot.lane.b32.xlu0 %v542, 8
      %v578 = vpop.permute.xlu0 %577
      %579 = vrot.lane.b32.xlu0 %v545, 8
      %v580 = vpop.permute.xlu0 %579
      %581 = vrot.lane.b32.xlu0 %v547, 8
      %v582 = vpop.permute.xlu0 %581
      %583 = vrot.lane.b32.xlu0 %v550, 8
      %v584 = vpop.permute.xlu0 %583
      %585 = vrot.lane.b32.xlu0 %v552, 8
      %v586 = vpop.permute.xlu0 %585
      %587 = vrot.lane.b32.xlu0 %v555, 8
      %v588 = vpop.permute.xlu0 %587
      %589 = vrot.lane.b32.xlu0 %v557, 8
      %v590 = vpop.permute.xlu0 %589
      %591 = vrot.lane.b32.xlu0 %v560, 8
      %v592 = vpop.permute.xlu0 %591
      %593 = vrot.lane.b32.xlu0 %v562, 8
      %v594 = vpop.permute.xlu0 %593
      %613 = vrot.lane.b32.xlu0 %v382, 12
      %v614 = vpop.permute.xlu0 %613
      %615 = vrot.lane.b32.xlu0 %v383, 12
      %v616 = vpop.permute.xlu0 %615
      %617 = vrot.lane.b32.xlu0 %v385, 12
      %v618 = vpop.permute.xlu0 %617
      %619 = vrot.lane.b32.xlu0 %v386, 12
      %v620 = vpop.permute.xlu0 %619
      %621 = vrot.lane.b32.xlu0 %v388, 12
      %v622 = vpop.permute.xlu0 %621
      %623 = vrot.lane.b32.xlu0 %v389, 12
      %v624 = vpop.permute.xlu0 %623
      %625 = vrot.lane.b32.xlu0 %v391, 12
      %v626 = vpop.permute.xlu0 %625
      %627 = vrot.lane.b32.xlu0 %v392, 12
      %v628 = vpop.permute.xlu0 %627
      %629 = vrot.lane.b32.xlu0 %v394, 12
      %v630 = vpop.permute.xlu0 %629
      %631 = vrot.lane.b32.xlu0 %v395, 12
      %v632 = vpop.permute.xlu0 %631
      %633 = vrot.lane.b32.xlu0 %v397, 12
      %v634 = vpop.permute.xlu0 %633
      %635 = vrot.lane.b32.xlu0 %v398, 12
      %v636 = vpop.permute.xlu0 %635
      %637 = vrot.lane.b32.xlu0 %v400, 12
      %v638 = vpop.permute.xlu0 %637
      %639 = vrot.lane.b32.xlu0 %v401, 12
      %v640 = vpop.permute.xlu0 %639
      %641 = vrot.lane.b32.xlu0 %v403, 12
      %v642 = vpop.permute.xlu0 %641
      %643 = vrot.lane.b32.xlu0 %v404, 12
      %v644 = vpop.permute.xlu0 %643
      %v662 = vrot.slane %v403, 1
      %v663 = vrot.slane %v404, 1
      %v664 = vsel %vm433, %v662, %v663
      %v665 = vrot.slane %v405, 1
      %v666 = vsel %vm433, %v663, %v665
      %667 = vrot.lane.b32.xlu0 %v441, 16
      %v668 = vpop.permute.xlu0 %667
      %669 = vrot.lane.b32.xlu0 %v443, 16
      %v670 = vpop.permute.xlu0 %669
      %671 = vrot.lane.b32.xlu0 %v446, 16
      %v672 = vpop.permute.xlu0 %671
      %673 = vrot.lane.b32.xlu0 %v448, 16
      %v674 = vpop.permute.xlu0 %673
      %675 = vrot.lane.b32.xlu0 %v451, 16
      %v676 = vpop.permute.xlu0 %675
      %677 = vrot.lane.b32.xlu0 %v453, 16
      %v678 = vpop.permute.xlu0 %677
      %679 = vrot.lane.b32.xlu0 %v456, 16
      %v680 = vpop.permute.xlu0 %679
      %681 = vrot.lane.b32.xlu0 %v458, 16
      %v682 = vpop.permute.xlu0 %681
      %683 = vrot.lane.b32.xlu0 %v461, 16
      %v684 = vpop.permute.xlu0 %683
      %685 = vrot.lane.b32.xlu0 %v463, 16
      %v686 = vpop.permute.xlu0 %685
      %687 = vrot.lane.b32.xlu0 %v466, 16
      %v688 = vpop.permute.xlu0 %687
      %689 = vrot.lane.b32.xlu0 %v468, 16
      %v690 = vpop.permute.xlu0 %689
      %691 = vrot.lane.b32.xlu0 %v471, 16
      %v692 = vpop.permute.xlu0 %691
      %693 = vrot.lane.b32.xlu0 %v473, 16
      %v694 = vpop.permute.xlu0 %693
      %695 = vrot.lane.b32.xlu0 %v664, 16
      %v696 = vpop.permute.xlu0 %695
      %697 = vrot.lane.b32.xlu0 %v666, 16
      %v698 = vpop.permute.xlu0 %697
      %v715 = vrot.slane %v403, 2
      %v716 = vrot.slane %v404, 2
      %v717 = vsel %vm522, %v715, %v716
      %v718 = vrot.slane %v405, 2
      %v719 = vsel %vm522, %v716, %v718
      %720 = vrot.lane.b32.xlu0 %v530, 20
      %v721 = vpop.permute.xlu0 %720
      %722 = vrot.lane.b32.xlu0 %v532, 20
      %v723 = vpop.permute.xlu0 %722
      %724 = vrot.lane.b32.xlu0 %v535, 20
      %v725 = vpop.permute.xlu0 %724
      %726 = vrot.lane.b32.xlu0 %v537, 20
      %v727 = vpop.permute.xlu0 %726
      %728 = vrot.lane.b32.xlu0 %v540, 20
      %v729 = vpop.permute.xlu0 %728
      %730 = vrot.lane.b32.xlu0 %v542, 20
      %v731 = vpop.permute.xlu0 %730
      %732 = vrot.lane.b32.xlu0 %v545, 20
      %v733 = vpop.permute.xlu0 %732
      %734 = vrot.lane.b32.xlu0 %v547, 20
      %v735 = vpop.permute.xlu0 %734
      %736 = vrot.lane.b32.xlu0 %v550, 20
      %v737 = vpop.permute.xlu0 %736
      %738 = vrot.lane.b32.xlu0 %v552, 20
      %v739 = vpop.permute.xlu0 %738
      %740 = vrot.lane.b32.xlu0 %v555, 20
      %v741 = vpop.permute.xlu0 %740
      %742 = vrot.lane.b32.xlu0 %v557, 20
      %v743 = vpop.permute.xlu0 %742
      %744 = vrot.lane.b32.xlu0 %v560, 20
      %v745 = vpop.permute.xlu0 %744
      %746 = vrot.lane.b32.xlu0 %v562, 20
      %v747 = vpop.permute.xlu0 %746
      %748 = vrot.lane.b32.xlu0 %v717, 20
      %v749 = vpop.permute.xlu0 %748
      %750 = vrot.lane.b32.xlu0 %v719, 20
      %v751 = vpop.permute.xlu0 %750
      %770 = vrot.lane.b32.xlu0 %v385, 24
      %v771 = vpop.permute.xlu0 %770
      %772 = vrot.lane.b32.xlu0 %v386, 24
      %v773 = vpop.permute.xlu0 %772
      %774 = vrot.lane.b32.xlu0 %v388, 24
      %v775 = vpop.permute.xlu0 %774
      %776 = vrot.lane.b32.xlu0 %v389, 24
      %v777 = vpop.permute.xlu0 %776
      %778 = vrot.lane.b32.xlu0 %v391, 24
      %v779 = vpop.permute.xlu0 %778
      %780 = vrot.lane.b32.xlu0 %v392, 24
      %v781 = vpop.permute.xlu0 %780
      %782 = vrot.lane.b32.xlu0 %v394, 24
      %v783 = vpop.permute.xlu0 %782
      %784 = vrot.lane.b32.xlu0 %v395, 24
      %v785 = vpop.permute.xlu0 %784
      %786 = vrot.lane.b32.xlu0 %v397, 24
      %v787 = vpop.permute.xlu0 %786
      %788 = vrot.lane.b32.xlu0 %v398, 24
      %v789 = vpop.permute.xlu0 %788
      %790 = vrot.lane.b32.xlu0 %v400, 24
      %v791 = vpop.permute.xlu0 %790
      %792 = vrot.lane.b32.xlu0 %v401, 24
      %v793 = vpop.permute.xlu0 %792
      %794 = vrot.lane.b32.xlu0 %v403, 24
      %v795 = vpop.permute.xlu0 %794
      %796 = vrot.lane.b32.xlu0 %v404, 24
      %v797 = vpop.permute.xlu0 %796
      %798 = vrot.lane.b32.xlu0 %v406, 24
      %v799 = vpop.permute.xlu0 %798
      %800 = vrot.lane.b32.xlu0 %v407, 24
      %v801 = vpop.permute.xlu0 %800
      %v819 = vrot.slane %v406, 1
      %v820 = vrot.slane %v407, 1
      %v821 = vsel %vm433, %v819, %v820
      %v822 = vrot.slane %v408, 1
      %v823 = vsel %vm433, %v820, %v822
      %824 = vrot.lane.b32.xlu0 %v446, 28
      %v825 = vpop.permute.xlu0 %824
      %826 = vrot.lane.b32.xlu0 %v448, 28
      %v827 = vpop.permute.xlu0 %826
      %828 = vrot.lane.b32.xlu0 %v451, 28
      %v829 = vpop.permute.xlu0 %828
      %830 = vrot.lane.b32.xlu0 %v453, 28
      %v831 = vpop.permute.xlu0 %830
      %832 = vrot.lane.b32.xlu0 %v456, 28
      %v833 = vpop.permute.xlu0 %832
      %834 = vrot.lane.b32.xlu0 %v458, 28
      %v835 = vpop.permute.xlu0 %834
      %836 = vrot.lane.b32.xlu0 %v461, 28
      %v837 = vpop.permute.xlu0 %836
      %838 = vrot.lane.b32.xlu0 %v463, 28
      %v839 = vpop.permute.xlu0 %838
      %840 = vrot.lane.b32.xlu0 %v466, 28
      %v841 = vpop.permute.xlu0 %840
      %842 = vrot.lane.b32.xlu0 %v468, 28
      %v843 = vpop.permute.xlu0 %842
      %844 = vrot.lane.b32.xlu0 %v471, 28
      %v845 = vpop.permute.xlu0 %844
      %846 = vrot.lane.b32.xlu0 %v473, 28
      %v847 = vpop.permute.xlu0 %846
      %848 = vrot.lane.b32.xlu0 %v664, 28
      %v849 = vpop.permute.xlu0 %848
      %850 = vrot.lane.b32.xlu0 %v666, 28
      %v851 = vpop.permute.xlu0 %850
      %852 = vrot.lane.b32.xlu0 %v821, 28
      %v853 = vpop.permute.xlu0 %852
      %854 = vrot.lane.b32.xlu0 %v823, 28
      %v855 = vpop.permute.xlu0 %854
      %v872 = vrot.slane %v406, 2
      %v873 = vrot.slane %v407, 2
      %v874 = vsel %vm522, %v872, %v873
      %v875 = vrot.slane %v408, 2
      %v876 = vsel %vm522, %v873, %v875
      %877 = vrot.lane.b32.xlu0 %v535, 32
      %v878 = vpop.permute.xlu0 %877
      %879 = vrot.lane.b32.xlu0 %v537, 32
      %v880 = vpop.permute.xlu0 %879
      %881 = vrot.lane.b32.xlu0 %v540, 32
      %v882 = vpop.permute.xlu0 %881
      %883 = vrot.lane.b32.xlu0 %v542, 32
      %v884 = vpop.permute.xlu0 %883
      %885 = vrot.lane.b32.xlu0 %v545, 32
      %v886 = vpop.permute.xlu0 %885
      %887 = vrot.lane.b32.xlu0 %v547, 32
      %v888 = vpop.permute.xlu0 %887
      %889 = vrot.lane.b32.xlu0 %v550, 32
      %v890 = vpop.permute.xlu0 %889
      %891 = vrot.lane.b32.xlu0 %v552, 32
      %v892 = vpop.permute.xlu0 %891
      %893 = vrot.lane.b32.xlu0 %v555, 32
      %v894 = vpop.permute.xlu0 %893
      %895 = vrot.lane.b32.xlu0 %v557, 32
      %v896 = vpop.permute.xlu0 %895
      %897 = vrot.lane.b32.xlu0 %v560, 32
      %v898 = vpop.permute.xlu0 %897
      %899 = vrot.lane.b32.xlu0 %v562, 32
      %v900 = vpop.permute.xlu0 %899
      %901 = vrot.lane.b32.xlu0 %v717, 32
      %v902 = vpop.permute.xlu0 %901
      %903 = vrot.lane.b32.xlu0 %v719, 32
      %v904 = vpop.permute.xlu0 %903
      %905 = vrot.lane.b32.xlu0 %v874, 32
      %v906 = vpop.permute.xlu0 %905
      %907 = vrot.lane.b32.xlu0 %v876, 32
      %v908 = vpop.permute.xlu0 %907
      %v925 = vsel %vm285, %v379, %v475
      %v926 = vsel %vm285, %v380, %v477
      %v927 = vsel %vm285, %v382, %v479
      %v928 = vsel %vm285, %v383, %v481
      %v929 = vsel %vm285, %v385, %v483
      %v930 = vsel %vm285, %v386, %v485
      %v931 = vsel %vm285, %v388, %v487
      %v932 = vsel %vm285, %v389, %v489
      %v933 = vsel %vm285, %v391, %v491
      %v934 = vsel %vm285, %v392, %v493
      %v935 = vsel %vm285, %v394, %v495
      %v936 = vsel %vm285, %v395, %v497
      %v937 = vsel %vm285, %v397, %v499
      %v938 = vsel %vm285, %v398, %v501
      %v939 = vsel %vm285, %v400, %v503
      %v940 = vsel %vm285, %v401, %v505
      %vm941 = vcmask 64512
      %v942 = vsel %vm941, %v925, %v564
      %v943 = vsel %vm941, %v926, %v566
      %v944 = vsel %vm941, %v927, %v568
      %v945 = vsel %vm941, %v928, %v570
      %v946 = vsel %vm941, %v929, %v572
      %v947 = vsel %vm941, %v930, %v574
      %v948 = vsel %vm941, %v931, %v576
      %v949 = vsel %vm941, %v932, %v578
      %v950 = vsel %vm941, %v933, %v580
      %v951 = vsel %vm941, %v934, %v582
      %v952 = vsel %vm941, %v935, %v584
      %v953 = vsel %vm941, %v936, %v586
      %v954 = vsel %vm941, %v937, %v588
      %v955 = vsel %vm941, %v938, %v590
      %v956 = vsel %vm941, %v939, %v592
      %v957 = vsel %vm941, %v940, %v594
      %vm958 = vcmask 97280
      %v959 = vsel %vm958, %v942, %v614
      %v960 = vsel %vm958, %v943, %v616
      %v961 = vsel %vm958, %v944, %v618
      %v962 = vsel %vm958, %v945, %v620
      %v963 = vsel %vm958, %v946, %v622
      %v964 = vsel %vm958, %v947, %v624
      %v965 = vsel %vm958, %v948, %v626
      %v966 = vsel %vm958, %v949, %v628
      %v967 = vsel %vm958, %v950, %v630
      %v968 = vsel %vm958, %v951, %v632
      %v969 = vsel %vm958, %v952, %v634
      %v970 = vsel %vm958, %v953, %v636
      %v971 = vsel %vm958, %v954, %v638
      %v972 = vsel %vm958, %v955, %v640
      %v973 = vsel %vm958, %v956, %v642
      %v974 = vsel %vm958, %v957, %v644
      %vm975 = vcmask 130048
      %v976 = vsel %vm975, %v959, %v668
      %v977 = vsel %vm975, %v960, %v670
      %v978 = vsel %vm975, %v961, %v672
      %v979 = vsel %vm975, %v962, %v674
      %v980 = vsel %vm975, %v963, %v676
      %v981 = vsel %vm975, %v964, %v678
      %v982 = vsel %vm975, %v965, %v680
      %v983 = vsel %vm975, %v966, %v682
      %v984 = vsel %vm975, %v967, %v684
      %v985 = vsel %vm975, %v968, %v686
      %v986 = vsel %vm975, %v969, %v688
      %v987 = vsel %vm975, %v970, %v690
      %v988 = vsel %vm975, %v971, %v692
      %v989 = vsel %vm975, %v972, %v694
      %v990 = vsel %vm975, %v973, %v696
      %v991 = vsel %vm975, %v974, %v698
      %vm992 = vcmask 162816
      %v993 = vsel %vm992, %v976, %v721
      %v994 = vsel %vm992, %v977, %v723
      %v995 = vsel %vm992, %v978, %v725
      %v996 = vsel %vm992, %v979, %v727
      %v997 = vsel %vm992, %v980, %v729
      %v998 = vsel %vm992, %v981, %v731
      %v999 = vsel %vm992, %v982, %v733
      %v1000 = vsel %vm992, %v983, %v735
      %v1001 = vsel %vm992, %v984, %v737
      %v1002 = vsel %vm992, %v985, %v739
      %v1003 = vsel %vm992, %v986, %v741
      %v1004 = vsel %vm992, %v987, %v743
      %v1005 = vsel %vm992, %v988, %v745
      %v1006 = vsel %vm992, %v989, %v747
      %v1007 = vsel %vm992, %v990, %v749
      %v1008 = vsel %vm992, %v991, %v751
      %vm1009 = vcmask 195584
      %v1010 = vsel %vm1009, %v993, %v771
      %v1011 = vsel %vm1009, %v994, %v773
      %v1012 = vsel %vm1009, %v995, %v775
      %v1013 = vsel %vm1009, %v996, %v777
      %v1014 = vsel %vm1009, %v997, %v779
      %v1015 = vsel %vm1009, %v998, %v781
      %v1016 = vsel %vm1009, %v999, %v783
      %v1017 = vsel %vm1009, %v1000, %v785
      %v1018 = vsel %vm1009, %v1001, %v787
      %v1019 = vsel %vm1009, %v1002, %v789
      %v1020 = vsel %vm1009, %v1003, %v791
      %v1021 = vsel %vm1009, %v1004, %v793
      %v1022 = vsel %vm1009, %v1005, %v795
      %v1023 = vsel %vm1009, %v1006, %v797
      %v1024 = vsel %vm1009, %v1007, %v799
      %v1025 = vsel %vm1009, %v1008, %v801
      %vm1026 = vcmask 228352
      %v1027 = vsel %vm1026, %v1010, %v825
      %v1028 = vsel %vm1026, %v1011, %v827
      %v1029 = vsel %vm1026, %v1012, %v829
      %v1030 = vsel %vm1026, %v1013, %v831
      %v1031 = vsel %vm1026, %v1014, %v833
      %v1032 = vsel %vm1026, %v1015, %v835
      %v1033 = vsel %vm1026, %v1016, %v837
      %v1034 = vsel %vm1026, %v1017, %v839
      %v1035 = vsel %vm1026, %v1018, %v841
      %v1036 = vsel %vm1026, %v1019, %v843
      %v1037 = vsel %vm1026, %v1020, %v845
      %v1038 = vsel %vm1026, %v1021, %v847
      %v1039 = vsel %vm1026, %v1022, %v849
      %v1040 = vsel %vm1026, %v1023, %v851
      %v1041 = vsel %vm1026, %v1024, %v853
      %v1042 = vsel %vm1026, %v1025, %v855
      %vm1043 = vcmask 261120
      %v1044 = vsel %vm1043, %v1027, %v878
      %v1045 = vsel %vm1043, %v1028, %v880
      %v1046 = vsel %vm1043, %v1029, %v882
      %v1047 = vsel %vm1043, %v1030, %v884
      %v1048 = vsel %vm1043, %v1031, %v886
      %v1049 = vsel %vm1043, %v1032, %v888
      %v1050 = vsel %vm1043, %v1033, %v890
      %v1051 = vsel %vm1043, %v1034, %v892
      %v1052 = vsel %vm1043, %v1035, %v894
      %v1053 = vsel %vm1043, %v1036, %v896
      %v1054 = vsel %vm1043, %v1037, %v898
      %v1055 = vsel %vm1043, %v1038, %v900
      %v1056 = vsel %vm1043, %v1039, %v902
      %v1057 = vsel %vm1043, %v1040, %v904
      %v1058 = vsel %vm1043, %v1041, %v906
      %v1059 = vsel %vm1043, %v1042, %v908
      %v1060 = vpack.c.bf16 %v1045, %v1044
      %v1061 = vpack.c.bf16 %v1047, %v1046
      %v1062 = vpack.c.bf16 %v1049, %v1048
      %v1063 = vpack.c.bf16 %v1051, %v1050
      %v1064 = vpack.c.bf16 %v1053, %v1052
      %v1065 = vpack.c.bf16 %v1055, %v1054
      %v1066 = vpack.c.bf16 %v1057, %v1056
      %v1067 = vpack.c.bf16 %v1059, %v1058
      %v1068 = vld [vmem:[%s262] sm:$0xf]
      %v1069 = vld [vmem:[%s262 + $0x4] sm:$0xf]
      %v1070 = vld [vmem:[%s262 + $0x8] sm:$0xf]
      %v1071 = vld [vmem:[%s262 + $0xc] sm:$0xf]
      %v1072 = vld [vmem:[%s262 + $0x10] sm:$0x3]
      %v1078 = vunpack.c.l.b16 %v1068
      %v1079 = vunpack.c.l.b16 %v1069
      %v1080 = vunpack.c.l.b16 %v1070
      %v1081 = vunpack.c.l.b16 %v1071
      %v1082 = vunpack.c.l.b16 %v1072
      %v1083 = vpack.c.b16 %v1079, %v1078
      %v1084 = vpack.c.b16 %v1081, %v1080
      %v1085 = vpack.c.b16 %v1082, %v1082
      %vm1088 = vcmask 293888
      %v1090 = vsel %vm1088, %v1060, 0
      %v1093 = vsel %vm1088, %v1061, 0
      %v1096 = vsel %vm1088, %v1062, 0
      %v1099 = vsel %vm1088, %v1063, 0
      %v1102 = vsel %vm1088, %v1064, 0
      %v1105 = vsel %vm1088, %v1065, 0
      %v1108 = vsel %vm1088, %v1066, 0
      %v1111 = vsel %vm1088, %v1067, 0
      %vm1113 = vcmask 1041408
      %v1115 = vsel %vm1113, %v1085, 0
      %1117 = vmatpush.bf16.msra.mxu0 0
      %1118 = vmatpush.bf16.msra.mxu0 0
      %1119 = vmatpush.bf16.msra.mxu0 0
      %1120 = vmatpush.bf16.msra.mxu0 0
      %1121 = vmatpush.bf16.msra.mxu0 0
      %1122 = vmatpush.bf16.msra.mxu0 %v1115
      %1123 = vmatpush.bf16.msra.mxu0 %v1084
      %1124 = vmatpush.bf16.msra.mxu0 %v1083
      %1125 = vmatmul.bf16.gmra.mxu0 %v1090
      %v1126 = vpop.f32.mrf.mxu0
      %v1127 = vadd.f32 0.0, %v1126
      %v1128 = vpop.f32.mrf.mxu0
      %v1129 = vadd.f32 0.0, %v1128
      %1130 = vmatmul.bf16.gmra.mxu0 %v1093
      %v1131 = vpop.f32.mrf.mxu0
      %v1132 = vadd.f32 0.0, %v1131
      %v1133 = vpop.f32.mrf.mxu0
      %v1134 = vadd.f32 0.0, %v1133
      %1135 = vmatmul.bf16.gmra.mxu0 %v1096
      %v1136 = vpop.f32.mrf.mxu0
      %v1137 = vadd.f32 0.0, %v1136
      %v1138 = vpop.f32.mrf.mxu0
      %v1139 = vadd.f32 0.0, %v1138
      %1140 = vmatmul.bf16.gmra.mxu0 %v1099
      %v1141 = vpop.f32.mrf.mxu0
      %v1142 = vadd.f32 0.0, %v1141
      %v1143 = vpop.f32.mrf.mxu0
      %v1144 = vadd.f32 0.0, %v1143
      %1145 = vmatmul.bf16.gmra.mxu0 %v1102
      %v1146 = vpop.f32.mrf.mxu0
      %v1147 = vadd.f32 0.0, %v1146
      %v1148 = vpop.f32.mrf.mxu0
      %v1149 = vadd.f32 0.0, %v1148
      %1150 = vmatmul.bf16.gmra.mxu0 %v1105
      %v1151 = vpop.f32.mrf.mxu0
      %v1152 = vadd.f32 0.0, %v1151
      %v1153 = vpop.f32.mrf.mxu0
      %v1154 = vadd.f32 0.0, %v1153
      %1155 = vmatmul.bf16.gmra.mxu0 %v1108
      %v1156 = vpop.f32.mrf.mxu0
      %v1157 = vadd.f32 0.0, %v1156
      %v1158 = vpop.f32.mrf.mxu0
      %v1159 = vadd.f32 0.0, %v1158
      %1160 = vmatmul.bf16.gmra.mxu0 %v1111
      %v1161 = vpop.f32.mrf.mxu0
      %v1162 = vadd.f32 0.0, %v1161
      %v1163 = vpop.f32.mrf.mxu0
      %v1164 = vadd.f32 0.0, %v1163
      %1165 = vdwg.mxu0
      %v1166 = vld [vmem:[%s265] sm:$0x1]
      %v1168 = vperm.slane %v1166, 0
      %v1170 = vmul.f32 %v1127, %v1168
      %v1171 = vmul.f32 %v1129, %v1168
      %v1172 = vmul.f32 %v1132, %v1168
      %v1173 = vmul.f32 %v1134, %v1168
      %v1174 = vmul.f32 %v1137, %v1168
      %v1175 = vmul.f32 %v1139, %v1168
      %v1176 = vmul.f32 %v1142, %v1168
      %v1177 = vmul.f32 %v1144, %v1168
      %v1178 = vmul.f32 %v1147, %v1168
      %v1179 = vmul.f32 %v1149, %v1168
      %v1180 = vmul.f32 %v1152, %v1168
      %v1181 = vmul.f32 %v1154, %v1168
      %v1182 = vmul.f32 %v1157, %v1168
      %v1183 = vmul.f32 %v1159, %v1168
      %v1184 = vmul.f32 %v1162, %v1168
      %v1185 = vmul.f32 %v1164, %v1168
      %v1186 = vld [vmem:[%s268] sm:$0x1]
      %v1188 = vperm.slane %v1186, 0
      %v1190 = vadd.f32 %v1170, %v1188
      %v1191 = vadd.f32 %v1171, %v1188
      %v1192 = vadd.f32 %v1172, %v1188
      %v1193 = vadd.f32 %v1173, %v1188
      %v1194 = vadd.f32 %v1174, %v1188
      %v1195 = vadd.f32 %v1175, %v1188
      %v1196 = vadd.f32 %v1176, %v1188
      %v1197 = vadd.f32 %v1177, %v1188
      %v1198 = vadd.f32 %v1178, %v1188
      %v1199 = vadd.f32 %v1179, %v1188
      %v1200 = vadd.f32 %v1180, %v1188
      %v1201 = vadd.f32 %v1181, %v1188
      %v1202 = vadd.f32 %v1182, %v1188
      %v1203 = vadd.f32 %v1183, %v1188
      %v1204 = vadd.f32 %v1184, %v1188
      %v1205 = vadd.f32 %v1185, %v1188
      %v1206 = vmax.f32 %v1190, 0.0
      %v1207 = vmax.f32 %v1191, 0.0
      %v1208 = vmax.f32 %v1192, 0.0
      %v1209 = vmax.f32 %v1193, 0.0
      %v1210 = vmax.f32 %v1194, 0.0
      %v1211 = vmax.f32 %v1195, 0.0
      %v1212 = vmax.f32 %v1196, 0.0
      %v1213 = vmax.f32 %v1197, 0.0
      %v1214 = vmax.f32 %v1198, 0.0
      %v1215 = vmax.f32 %v1199, 0.0
      %v1216 = vmax.f32 %v1200, 0.0
      %v1217 = vmax.f32 %v1201, 0.0
      %v1218 = vmax.f32 %v1202, 0.0
      %v1219 = vmax.f32 %v1203, 0.0
      %v1220 = vmax.f32 %v1204, 0.0
      %v1221 = vmax.f32 %v1205, 0.0
      %v1222 = vpack.c.bf16 %v1206, %v1206
      %v1223 = vpack.c.bf16 %v1207, %v1207
      %v1224 = vpack.c.bf16 %v1208, %v1208
      %v1225 = vpack.c.bf16 %v1209, %v1209
      %v1226 = vpack.c.bf16 %v1210, %v1210
      %v1227 = vpack.c.bf16 %v1211, %v1211
      %v1228 = vpack.c.bf16 %v1212, %v1212
      %v1229 = vpack.c.bf16 %v1213, %v1213
      %v1230 = vpack.c.bf16 %v1214, %v1214
      %v1231 = vpack.c.bf16 %v1215, %v1215
      %v1232 = vpack.c.bf16 %v1216, %v1216
      %v1233 = vpack.c.bf16 %v1217, %v1217
      %v1234 = vpack.c.bf16 %v1218, %v1218
      %v1235 = vpack.c.bf16 %v1219, %v1219
      %v1236 = vpack.c.bf16 %v1220, %v1220
      %v1237 = vpack.c.bf16 %v1221, %v1221
      %vm1238 = vcmask 125952
      %1239 = vst.msk [vmem:[%s281] sm:$0xf] %vm1238, %v1222
      %1240 = vst.msk [vmem:[%s281 + $0x4] sm:$0xf] %vm1238, %v1223
      %1241 = vst.msk [vmem:[%s281 + $0x8] sm:$0xf] %vm1238, %v1224
      %1242 = vst.msk [vmem:[%s281 + $0xc] sm:$0xf] %vm1238, %v1225
      %1243 = vst.msk [vmem:[%s281 + $0x10] sm:$0xf] %vm1238, %v1226
      %1244 = vst.msk [vmem:[%s281 + $0x14] sm:$0xf] %vm1238, %v1227
      %1245 = vst.msk [vmem:[%s281 + $0x18] sm:$0xf] %vm1238, %v1228
      %1246 = vst.msk [vmem:[%s281 + $0x1c] sm:$0xf] %vm1238, %v1229
      %1247 = vst.msk [vmem:[%s281 + $0x20] sm:$0xf] %vm1238, %v1230
      %1248 = vst.msk [vmem:[%s281 + $0x24] sm:$0xf] %vm1238, %v1231
      %1249 = vst.msk [vmem:[%s281 + $0x28] sm:$0xf] %vm1238, %v1232
      %1250 = vst.msk [vmem:[%s281 + $0x2c] sm:$0xf] %vm1238, %v1233
      %1251 = vst.msk [vmem:[%s281 + $0x30] sm:$0xf] %vm1238, %v1234
      %1252 = vst.msk [vmem:[%s281 + $0x34] sm:$0xf] %vm1238, %v1235
      %1253 = vst.msk [vmem:[%s281 + $0x38] sm:$0xf] %vm1238, %v1236
      %1254 = vst.msk [vmem:[%s281 + $0x3c] sm:$0xf] %vm1238, %v1237
      %s1255 = smul.u32 8, %s21
      %p1256 = scmp.lt.s32.totalorder %s20, 1
      %s1257 = scalar_select %p1256, %s20, 1
      %p1258 = scmp.lt.s32.totalorder %s1255, 15
      %s1259 = scalar_select %p1258, %s1255, 15
      %p1260 = scmp.lt.s32.totalorder %s22, 0
      %s1261 = scalar_select %p1260, %s22, 0
      %s1262 = smul.addr %s1259, 2
      %s1263 = sadd.s32 %s1261, %s1262
      %s1264 = smul.addr %s1257, 32
      %s1265 = sadd.s32 %s1263, %s1264
      %s1266 = smul.addr %s1265, 4
      %s1267 = scalar_lea.vmem %s4, %s1266
      // Predicated region
      $region45: #{conv_block_forward.2} parent=35 // pred_check
        %p1268 = pneg %p160
      $region46: #{conv_block_forward.2} parent=35 // pred_check_branch
        %1270 = sbr.rel (%p1268) target = $region48
      $region47: #{conv_block_forward.2} parent=35 // pred_region
        %s1271 = smul.u32 8, %s21
      $region48: #{conv_block_forward.2} parent=35 // pred_fallthru
        _
    $region36: #{conv_block_forward.2} parent=5 // pred_fallthru
      _
    %p1272 = scmp.le.s32.totalorder 2, %s10
    // Predicated region
    $region49: #{conv_block_forward.2} parent=5 // pred_check
      %p1273 = pneg %p1272
    $region50: #{conv_block_forward.2} parent=5 // pred_check_branch
      %1275 = sbr.rel (%p1273) target = $region52
    $region51: #{conv_block_forward.2} parent=5 // pred_region
      %s1276 = ssub.s32 %s10, 2
      // Predicated region
      $region53: #{conv_block_forward.2} parent=51 // pred_check
        %p1277 = pneg %p166
      $region54: #{conv_block_forward.2} parent=51 // pred_check_branch
        %1279 = sbr.rel (%p1277) target = $region56
      $region55: #{conv_block_forward.2} parent=51 // pred_region
        %s1280 = smul.u32 8, %s24
        %p1281 = scmp.lt.s32.totalorder %s23, 1
        %s1282 = scalar_select %p1281, %s23, 1
        %p1283 = scmp.lt.s32.totalorder %s1280, 15
        %s1284 = scalar_select %p1283, %s1280, 15
        %p1285 = scmp.lt.s32.totalorder %s25, 0
        %s1286 = scalar_select %p1285, %s25, 0
        %s1287 = smul.addr %s1284, 2
        %s1288 = sadd.s32 %s1286, %s1287
        %s1289 = smul.addr %s1282, 32
        %s1290 = sadd.s32 %s1288, %s1289
        %s1291 = smul.addr %s1290, 4
        %s1292 = scalar_lea.vmem %s4, %s1291
      $region56: #{conv_block_forward.2} parent=51 // pred_fallthru
        _
    $region52: #{conv_block_forward.2} parent=5 // pred_fallthru
      _
  $region6: #{conv_block_forward.2} parent=0 // loop_footer
    %s14 = sadd.s32 1, %s10
  $region7: #{conv_block_forward.2} parent=0 // loop_footer_branch
    %9 = sbr.rel target = $region3
  $region8: #{conv_block_forward.2} parent=0 // loop_exit
    _

// kernel: conv_block_forward.3
$region0: #{conv_block_forward.3}
  #allocation0 [shape = 'u32[]', space=smem, size = 0x4, offset = 0x4, fixed_abs, tag = 'smem constant byte address 0x4 - core index']
  #allocation1 [shape = 'u32[72,128]{1,0:T(1,128)}', space=vmem, size = 0x9000, scoped, tag = 'internal scratch']
  #allocation2 [shape = 'f32[10,18,16]{2,1,0:T(8,128)}', space=vmem, size = 0x1e000, scoped, tag = 'scratch operand']
  %s0 = inlined_call_operand.vmem [shape: bf16[2,16,16,16], index: 0, kind: input, shape index: {}]
  %s1 = inlined_call_operand.vmem [shape: bf16[144,16], index: 1, kind: input, shape index: {}]
  %s2 = inlined_call_operand.vmem [shape: f32[1,16], index: 2, kind: input, shape index: {}]
  %s3 = inlined_call_operand.vmem [shape: f32[1,16], index: 3, kind: input, shape index: {}]
  %s4 = inlined_call_operand.vmem [shape: bf16[32,128], index: 4, kind: input, shape index: {}]
  %s5 = inlined_call_operand.hbm [shape: f32[2,8,8,16], index: 5, kind: output, shape index: {}]
  %s6 = sld [smem:[#allocation0]]
  $region61: #{conv_block_forward.3} parent=0
    _
  %s8 = ssub.s32 1, %s6
  %s9 = scalar_select 0, %s8, %s6
  $region1: #{conv_block_forward.3} parent=0
    #allocation3 [shape = 'u8[32768]{0}', space=vmem, size = 0x8000, scoped, tag = 'output window, operand 0']
    #allocation4 [shape = 's32[2]{0}', space=sflag, size = 0x8, scoped, tag = 'scoped memory for conv_block_forward.3']
    %10 = vsyncpa [#allocation4], 0
    %s11 = scalar_lea.sflag [#allocation4], 1
    %12 = vsyncpa %s11, 0
    loop: start=0, step=1, limit=6
    $region2: #{conv_block_forward.3} parent=1 // loop_pre_header
      _
    $region3: #{conv_block_forward.3} parent=1 // loop_header
      %s14 = sphi 0, %s18
      %p15 = scmp.ge.s32.totalorder %s14, 6
      %s21 = sphi 0, %s40
      %s22 = sphi 0, %s36
      %s23 = sphi 0, %s32
      %s24 = sphi 0, %s21
      %s25 = sphi 0, %s22
      %s26 = sphi 0, %s23
      %s27 = sphi 0, %s24
      %s28 = sphi 0, %s25
      %s29 = sphi 0, %s26
      %s43 = sphi 0, %s45
      %s46 = sphi 0, %s43
      %s47 = sphi 0, %s46
      %s63 = sphi 0, %s47
      %s69 = sphi 0, %s71
      %s72 = sphi 0, %s69
      %s73 = sphi 0, %s72
      %s89 = sphi 0, %s73
      %s95 = sphi 0, %s97
      %s98 = sphi 0, %s95
      %s99 = sphi 0, %s98
      %s115 = sphi 0, %s99
      %s121 = sphi 0, %s123
      %s124 = sphi 0, %s121
      %s125 = sphi 0, %s124
      %s141 = sphi 0, %s125
      %s145 = sphi 0, %s145
      %s147 = sphi 0, %s145
      %s148 = sphi 0, %s147
      %s162 = sphi 0, %s148
      %s172 = sphi 0, %s174
      %s175 = sphi 0, %s172
      %s176 = sphi 0, %s175
      %s192 = sphi 0, %s176
    $region4: #{conv_block_forward.3} parent=1 // loop_header_branch
      %17 = sbr.rel (%p15) target = $region8
    $region5: #{conv_block_forward.3} parent=1 // loop_body
      %s19 = ssub.s32 %s14, 1
      %s20 = ssub.s32 %s14, 2
      %s30 = sadd.s32 1, %s23
      %p31 = scmp.ge.s32.totalorder %s30, 1
      %s32 = scalar_select %p31, 0, %s30
      %s33 = sadd.s32 1, %s22
      %s34 = scalar_select %p31, %s33, %s22
      %p35 = scmp.ge.s32.totalorder %s34, 2
      %s36 = scalar_select %p35, 0, %s34
      %s37 = sadd.s32 1, %s21
      %s38 = scalar_select %p35, %s37, %s21
      %p39 = scmp.ge.s32.totalorder %s38, 2
      %s40 = scalar_select %p39, 0, %s38
      %s41 = ssub.s32 %s21, %s40
      %p42 = scmp.eq.s32.totalorder %s41, 0
      %s44 = sadd.s32 %s43, 1
      %s45 = scalar_select %p42, %s43, %s44
      %p48 = pneg %p42
      %p49 = scmp.eq.s32.totalorder %s14, 3
      %p50 = por %p48, %p49
      %p51 = scmp.ne.s32.totalorder %s43, %s46
      %p52 = scmp.eq.s32.totalorder %s14, 0
      %p53 = por %p51, %p52
      %p54 = scmp.ne.s32.totalorder %s43, %s46
      %p55 = scmp.eq.s32.totalorder %s19, 3
      %p56 = por %p54, %p55
      %p57 = scmp.ne.s32.totalorder %s46, %s47
      %p58 = scmp.eq.s32.totalorder %s19, 0
      %p59 = por %p57, %p58
      %p60 = scmp.ne.s32.totalorder %s46, %s47
      %p61 = scmp.eq.s32.totalorder %s20, 3
      %p62 = por %p60, %p61
      %p64 = scmp.ne.s32.totalorder %s47, %s63
      %p65 = scmp.eq.s32.totalorder %s20, 0
      %p66 = por %p64, %p65
      %s67 = ssub.s32 %s23, %s32
      %p68 = scmp.eq.s32.totalorder %s67, 0
      %s70 = sadd.s32 %s69, 1
      %s71 = scalar_select %p68, %s69, %s70
      %p74 = pneg %p68
      %p75 = scmp.eq.s32.totalorder %s14, 3
      %p76 = por %p74, %p75
      %p77 = scmp.ne.s32.totalorder %s69, %s72
      %p78 = scmp.eq.s32.totalorder %s14, 0
      %p79 = por %p77, %p78
      %p80 = scmp.ne.s32.totalorder %s69, %s72
      %p81 = scmp.eq.s32.totalorder %s19, 3
      %p82 = por %p80, %p81
      %p83 = scmp.ne.s32.totalorder %s72, %s73
      %p84 = scmp.eq.s32.totalorder %s19, 0
      %p85 = por %p83, %p84
      %p86 = scmp.ne.s32.totalorder %s72, %s73
      %p87 = scmp.eq.s32.totalorder %s20, 3
      %p88 = por %p86, %p87
      %p90 = scmp.ne.s32.totalorder %s73, %s89
      %p91 = scmp.eq.s32.totalorder %s20, 0
      %p92 = por %p90, %p91
      %s93 = ssub.s32 %s23, %s32
      %p94 = scmp.eq.s32.totalorder %s93, 0
      %s96 = sadd.s32 %s95, 1
      %s97 = scalar_select %p94, %s95, %s96
      %p100 = pneg %p94
      %p101 = scmp.eq.s32.totalorder %s14, 3
      %p102 = por %p100, %p101
      %p103 = scmp.ne.s32.totalorder %s95, %s98
      %p104 = scmp.eq.s32.totalorder %s14, 0
      %p105 = por %p103, %p104
      %p106 = scmp.ne.s32.totalorder %s95, %s98
      %p107 = scmp.eq.s32.totalorder %s19, 3
      %p108 = por %p106, %p107
      %p109 = scmp.ne.s32.totalorder %s98, %s99
      %p110 = scmp.eq.s32.totalorder %s19, 0
      %p111 = por %p109, %p110
      %p112 = scmp.ne.s32.totalorder %s98, %s99
      %p113 = scmp.eq.s32.totalorder %s20, 3
      %p114 = por %p112, %p113
      %p116 = scmp.ne.s32.totalorder %s99, %s115
      %p117 = scmp.eq.s32.totalorder %s20, 0
      %p118 = por %p116, %p117
      %s119 = ssub.s32 %s23, %s32
      %p120 = scmp.eq.s32.totalorder %s119, 0
      %s122 = sadd.s32 %s121, 1
      %s123 = scalar_select %p120, %s121, %s122
      %p126 = pneg %p120
      %p127 = scmp.eq.s32.totalorder %s14, 3
      %p128 = por %p126, %p127
      %p129 = scmp.ne.s32.totalorder %s121, %s124
      %p130 = scmp.eq.s32.totalorder %s14, 0
      %p131 = por %p129, %p130
      %p132 = scmp.ne.s32.totalorder %s121, %s124
      %p133 = scmp.eq.s32.totalorder %s19, 3
      %p134 = por %p132, %p133
      %p135 = scmp.ne.s32.totalorder %s124, %s125
      %p136 = scmp.eq.s32.totalorder %s19, 0
      %p137 = por %p135, %p136
      %p138 = scmp.ne.s32.totalorder %s124, %s125
      %p139 = scmp.eq.s32.totalorder %s20, 3
      %p140 = por %p138, %p139
      %p142 = scmp.ne.s32.totalorder %s125, %s141
      %p143 = scmp.eq.s32.totalorder %s20, 0
      %p144 = por %p142, %p143
      %s146 = sadd.s32 %s145, 1
      %p149 = scmp.eq.s32.totalorder %s14, 3
      %p150 = scmp.ne.s32.totalorder %s145, %s147
      %p151 = scmp.eq.s32.totalorder %s14, 0
      %p152 = por %p150, %p151
      %p153 = scmp.ne.s32.totalorder %s145, %s147
      %p154 = scmp.eq.s32.totalorder %s19, 3
      %p155 = por %p153, %p154
      %p156 = scmp.ne.s32.totalorder %s147, %s148
      %p157 = scmp.eq.s32.totalorder %s19, 0
      %p158 = por %p156, %p157
      %p159 = scmp.ne.s32.totalorder %s147, %s148
      %p160 = scmp.eq.s32.totalorder %s20, 3
      %p161 = por %p159, %p160
      %p163 = scmp.ne.s32.totalorder %s148, %s162
      %p164 = scmp.eq.s32.totalorder %s20, 0
      %p165 = por %p163, %p164
      %s166 = ssub.s32 %s21, %s40
      %s167 = ssub.s32 %s22, %s36
      %s168 = sor.u32 %s166, %s167
      %s169 = ssub.s32 %s23, %s32
      %s170 = sor.u32 %s168, %s169
      %p171 = scmp.eq.s32.totalorder %s170, 0
      %s173 = sadd.s32 %s172, 1
      %s174 = scalar_select %p171, %s172, %s173
      %p177 = pneg %p171
      %p178 = scmp.eq.s32.totalorder %s14, 3
      %p179 = por %p177, %p178
      %p180 = scmp.ne.s32.totalorder %s172, %s175
      %p181 = scmp.eq.s32.totalorder %s14, 0
      %p182 = por %p180, %p181
      %p183 = scmp.ne.s32.totalorder %s172, %s175
      %p184 = scmp.eq.s32.totalorder %s19, 3
      %p185 = por %p183, %p184
      %p186 = scmp.ne.s32.totalorder %s175, %s176
      %p187 = scmp.eq.s32.totalorder %s19, 0
      %p188 = por %p186, %p187
      %p189 = scmp.ne.s32.totalorder %s175, %s176
      %p190 = scmp.eq.s32.totalorder %s20, 3
      %p191 = por %p189, %p190
      %p193 = scmp.ne.s32.totalorder %s176, %s192
      %p194 = scmp.eq.s32.totalorder %s20, 0
      %p195 = por %p193, %p194
      %p196 = scmp.le.s32.totalorder 1, %s14
      %p197 = scmp.lt.s32.totalorder %s14, 5
      %p198 = pnand %p196, %p197
      %p199 = pneg %p198
      // Predicated region
      $region9: #{conv_block_forward.3} parent=5 // pred_check
        _
      $region10: #{conv_block_forward.3} parent=5 // pred_check_branch
        %201 = sbr.rel (%p198) target = $region12
      $region11: #{conv_block_forward.3} parent=5 // pred_region
        %s202 = ssub.s32 %s14, 1
        // Predicated region
        $region13: #{conv_block_forward.3} parent=11 // pred_check
          %p203 = pneg %p85
        $region14: #{conv_block_forward.3} parent=11 // pred_check_branch
          %205 = sbr.rel (%p203) target = $region16
        $region15: #{conv_block_forward.3} parent=11 // pred_region
          %p206 = scmp.lt.s32.totalorder %s26, 0
          %s207 = scalar_select %p206, %s26, 0
          %s208 = smul.addr %s207, 4
          %s209 = scalar_lea.vmem %s1, %s208
        $region16: #{conv_block_forward.3} parent=11 // pred_fallthru
          _
        // Predicated region
        $region17: #{conv_block_forward.3} parent=11 // pred_check
          %p210 = pneg %p111
        $region18: #{conv_block_forward.3} parent=11 // pred_check_branch
          %212 = sbr.rel (%p210) target = $region20
        $region19: #{conv_block_forward.3} parent=11 // pred_region
          %p213 = scmp.lt.s32.totalorder %s26, 0
          %s214 = scalar_select %p213, %s26, 0
          %s215 = scalar_lea.vmem %s2, %s214
        $region20: #{conv_block_forward.3} parent=11 // pred_fallthru
          _
        // Predicated region
        $region21: #{conv_block_forward.3} parent=11 // pred_check
          %p216 = pneg %p137
        $region22: #{conv_block_forward.3} parent=11 // pred_check_branch
          %218 = sbr.rel (%p216) target = $region24
        $region23: #{conv_block_forward.3} parent=11 // pred_region
          %p219 = scmp.lt.s32.totalorder %s26, 0
          %s220 = scalar_select %p219, %s26, 0
          %s221 = scalar_lea.vmem %s3, %s220
        $region24: #{conv_block_forward.3} parent=11 // pred_fallthru
          _
        // Predicated region
        $region25: #{conv_block_forward.3} parent=11 // pred_check
          %p222 = pneg %p158
        $region26: #{conv_block_forward.3} parent=11 // pred_check_branch
          %224 = sbr.rel (%p222) target = $region28
        $region27: #{conv_block_forward.3} parent=11 // pred_region
          _
        $region28: #{conv_block_forward.3} parent=11 // pred_fallthru
          _
      $region12: #{conv_block_forward.3} parent=5 // pred_fallthru
        _
      %p225 = scmp.lt.s32.totalorder %s14, 4
      // Predicated region
      $region29: #{conv_block_forward.3} parent=5 // pred_check
        %p226 = pneg %p225
      $region30: #{conv_block_forward.3} parent=5 // pred_check_branch
        %228 = sbr.rel (%p226) target = $region32
      $region31: #{conv_block_forward.3} parent=5 // pred_region
        // Predicated region
        $region33: #{conv_block_forward.3} parent=31 // pred_check
          %p229 = pneg %p53
        $region34: #{conv_block_forward.3} parent=31 // pred_check_branch
          %231 = sbr.rel (%p229) target = $region36
        $region35: #{conv_block_forward.3} parent=31 // pred_region
          %p232 = scmp.lt.s32.totalorder %s21, 1
          %s233 = scalar_select %p232, %s21, 1
          %s234 = smul.addr %s233, 32
          %s235 = smul.addr %s234, 4
          %s236 = scalar_lea.vmem %s0, %s235
        $region36: #{conv_block_forward.3} parent=31 // pred_fallthru
          _
      $region32: #{conv_block_forward.3} parent=5 // pred_fallthru
        _
      %p237 = scmp.le.s32.totalorder 1, %s14
      %p238 = scmp.lt.s32.totalorder %s14, 5
      %p239 = pnand %p237, %p238
      %p240 = pneg %p239
      // Predicated region
      $region37: #{conv_block_forward.3} parent=5 // pred_check
        _
      $region38: #{conv_block_forward.3} parent=5 // pred_check_branch
        %242 = sbr.rel (%p239) target = $region40
      $region39: #{conv_block_forward.3} parent=5 // pred_region
        %s243 = ssub.s32 %s14, 1
        %p244 = scmp.lt.s32.totalorder %s24, 1
        %s245 = scalar_select %p244, %s24, 1
        %s246 = smul.addr %s245, 32
        %s247 = smul.addr %s246, 4
        %s248 = scalar_lea.vmem %s0, %s247
        %p249 = pneg %p59
        %p250 = pneg %p56
        %p251 = scmp.lt.s32.totalorder %s26, 0
        %s252 = scalar_select %p251, %s26, 0
        %s253 = smul.addr %s252, 4
        %s254 = scalar_lea.vmem %s1, %s253
        %p255 = pneg %p85
        %p256 = pneg %p82
        %p257 = scmp.lt.s32.totalorder %s26, 0
        %s258 = scalar_select %p257, %s26, 0
        %s259 = scalar_lea.vmem %s2, %s258
        %p260 = pneg %p111
        %p261 = pneg %p108
        %p262 = scmp.lt.s32.totalorder %s26, 0
        %s263 = scalar_select %p262, %s26, 0
        %s264 = scalar_lea.vmem %s3, %s263
        %p265 = pneg %p137
        %p266 = pneg %p134
        %p267 = pneg %p158
        %p268 = pneg %p155
        %p269 = pneg %p188
        %p270 = pneg %p185
        %s271 = sand.u32 %s175, 1
        %s272 = scalar_lea.sflag [#allocation4], %s271
        %s273 = sand.u32 %s175, 1
        %s274 = smul.addr %s273, 32
        %s275 = scalar_lea.vmem [#allocation3], %s274
        %p276 = scmp.lt.s32.totalorder %s24, 1
        %s277 = scalar_select %p276, %s24, 1
        %s278 = smul.addr %s277, 32
        %s279 = smul.addr %s278, 4
        %s280 = scalar_lea.vmem %s0, %s279
        %p281 = scmp.lt.s32.totalorder %s26, 0
        %s282 = scalar_select %p281, %s26, 0
        %s283 = smul.addr %s282, 4
        %s284 = scalar_lea.vmem %s1, %s283
        %p285 = scmp.lt.s32.totalorder %s26, 0
        %s286 = scalar_select %p285, %s26, 0
        %s287 = scalar_lea.vmem %s2, %s286
        %p288 = scmp.lt.s32.totalorder %s26, 0
        %s289 = scalar_select %p288, %s26, 0
        %s290 = scalar_lea.vmem %s3, %s289
        %s291 = smul.u32 4, %s25
        %s293 = smul.u32 %s25, 8
        %vm294 = vcmask 130048
        %295 = vst.msk [vmem:[#allocation2] sm:$0xff] %vm294, 0.0
        %296 = vst.msk [vmem:[#allocation2 + $0x8] sm:$0xff] %vm294, 0.0
        %vm297 = vcmask 123904
        %298 = vst.msk [vmem:[#allocation2 + $0x10] sm:$0x3] %vm297, 0.0
        %299 = vst.msk [vmem:[#allocation2 + $0x18] sm:$0xff] %vm294, 0.0
        %300 = vst.msk [vmem:[#allocation2 + $0x20] sm:$0xff] %vm294, 0.0
        %301 = vst.msk [vmem:[#allocation2 + $0x28] sm:$0x3] %vm297, 0.0
        %302 = vst.msk [vmem:[#allocation2 + $0x30] sm:$0xff] %vm294, 0.0
        %303 = vst.msk [vmem:[#allocation2 + $0x38] sm:$0xff] %vm294, 0.0
        %304 = vst.msk [vmem:[#allocation2 + $0x40] sm:$0x3] %vm297, 0.0
        %305 = vst.msk [vmem:[#allocation2 + $0x48] sm:$0xff] %vm294, 0.0
        %306 = vst.msk [vmem:[#allocation2 + $0x50] sm:$0xff] %vm294, 0.0
        %307 = vst.msk [vmem:[#allocation2 + $0x58] sm:$0x3] %vm297, 0.0
        %308 = vst.msk [vmem:[#allocation2 + $0x60] sm:$0xff] %vm294, 0.0
        %309 = vst.msk [vmem:[#allocation2 + $0x68] sm:$0xff] %vm294, 0.0
        %310 = vst.msk [vmem:[#allocation2 + $0x70] sm:$0x3] %vm297, 0.0
        %311 = vst.msk [vmem:[#allocation2 + $0x78] sm:$0xff] %vm294, 0.0
        %312 = vst.msk [vmem:[#allocation2 + $0x80] sm:$0xff] %vm294, 0.0
        %313 = vst.msk [vmem:[#allocation2 + $0x88] sm:$0x3] %vm297, 0.0
        %314 = vst.msk [vmem:[#allocation2 + $0x90] sm:$0xff] %vm294, 0.0
        %315 = vst.msk [vmem:[#allocation2 + $0x98] sm:$0xff] %vm294, 0.0
        %316 = vst.msk [vmem:[#allocation2 + $0xa0] sm:$0x3] %vm297, 0.0
        %317 = vst.msk [vmem:[#allocation2 + $0xa8] sm:$0xff] %vm294, 0.0
        %318 = vst.msk [vmem:[#allocation2 + $0xb0] sm:$0xff] %vm294, 0.0
        %319 = vst.msk [vmem:[#allocation2 + $0xb8] sm:$0x3] %vm297, 0.0
        %320 = vst.msk [vmem:[#allocation2 + $0xc0] sm:$0xff] %vm294, 0.0
        %321 = vst.msk [vmem:[#allocation2 + $0xc8] sm:$0xff] %vm294, 0.0
        %322 = vst.msk [vmem:[#allocation2 + $0xd0] sm:$0x3] %vm297, 0.0
        %323 = vst.msk [vmem:[#allocation2 + $0xd8] sm:$0xff] %vm294, 0.0
        %324 = vst.msk [vmem:[#allocation2 + $0xe0] sm:$0xff] %vm294, 0.0
        %325 = vst.msk [vmem:[#allocation2 + $0xe8] sm:$0x3] %vm297, 0.0
        %s326 = smul.u32 %s293, 2
        %s327 = smul.addr %s326, 4
        %s328 = scalar_lea.vmem %s280, %s327
        %v329 = vld [vmem:[%s328] sm:$0xf]
        %v330 = vld [vmem:[%s328 + $0x4] sm:$0xf]
        %v331 = vld [vmem:[%s328 + $0x8] sm:$0xf]
        %v332 = vld [vmem:[%s328 + $0xc] sm:$0xf]
        %v333 = vld [vmem:[%s328 + $0x10] sm:$0xf]
        %v334 = vld [vmem:[%s328 + $0x14] sm:$0xf]
        %v335 = vld [vmem:[%s328 + $0x18] sm:$0xf]
        %v336 = vld [vmem:[%s328 + $0x1c] sm:$0xf]
        %v337 = vld [vmem:[%s328 + $0x20] sm:$0xf]
        %v338 = vld [vmem:[%s328 + $0x24] sm:$0xf]
        %v339 = vld [vmem:[%s328 + $0x28] sm:$0xf]
        %v340 = vld [vmem:[%s328 + $0x2c] sm:$0xf]
        %v341 = vld [vmem:[%s328 + $0x30] sm:$0xf]
        %v342 = vld [vmem:[%s328 + $0x34] sm:$0xf]
        %v343 = vld [vmem:[%s328 + $0x38] sm:$0xf]
        %v344 = vld [vmem:[%s328 + $0x3c] sm:$0xf]
        %v345 = vunpack.c.l.bf16 %v329
        %v346 = vunpack.c.l.bf16 %v330
        %v347 = vunpack.c.l.bf16 %v331
        %v348 = vunpack.c.l.bf16 %v332
        %v349 = vunpack.c.l.bf16 %v333
        %v350 = vunpack.c.l.bf16 %v334
        %v351 = vunpack.c.l.bf16 %v335
        %v352 = vunpack.c.l.bf16 %v336
        %v353 = vunpack.c.l.bf16 %v337
        %v354 = vunpack.c.l.bf16 %v338
        %v355 = vunpack.c.l.bf16 %v339
        %v356 = vunpack.c.l.bf16 %v340
        %v357 = vunpack.c.l.bf16 %v341
        %v358 = vunpack.c.l.bf16 %v342
        %v359 = vunpack.c.l.bf16 %v343
        %v360 = vunpack.c.l.bf16 %v344
        %s361 = scalar_lea.vmem [#allocation2], 24
        %362 = vst.msk [vmem:[%s361 + $0x1] sm:$0xff] %vm294, %v345
        %363 = vst.msk [vmem:[%s361 + $0x9] sm:$0xff] %vm294, %v346
        %364 = vst.msk [vmem:[%s361 + $0x19] sm:$0xff] %vm294, %v347
        %365 = vst.msk [vmem:[%s361 + $0x21] sm:$0xff] %vm294, %v348
        %366 = vst.msk [vmem:[%s361 + $0x31] sm:$0xff] %vm294, %v349
        %367 = vst.msk [vmem:[%s361 + $0x39] sm:$0xff] %vm294, %v350
        %368 = vst.msk [vmem:[%s361 + $0x49] sm:$0xff] %vm294, %v351
        %369 = vst.msk [vmem:[%s361 + $0x51] sm:$0xff] %vm294, %v352
        %370 = vst.msk [vmem:[%s361 + $0x61] sm:$0xff] %vm294, %v353
        %371 = vst.msk [vmem:[%s361 + $0x69] sm:$0xff] %vm294, %v354
        %372 = vst.msk [vmem:[%s361 + $0x79] sm:$0xff] %vm294, %v355
        %373 = vst.msk [vmem:[%s361 + $0x81] sm:$0xff] %vm294, %v356
        %374 = vst.msk [vmem:[%s361 + $0x91] sm:$0xff] %vm294, %v357
        %375 = vst.msk [vmem:[%s361 + $0x99] sm:$0xff] %vm294, %v358
        %376 = vst.msk [vmem:[%s361 + $0xa9] sm:$0xff] %vm294, %v359
        %377 = vst.msk [vmem:[%s361 + $0xb1] sm:$0xff] %vm294, %v360
        %p378 = scmp.gt.s32.totalorder %s25, 0
        // Predicated region
        $region41: #{conv_block_forward.3} parent=39 // pred_check
          %p379 = pneg %p378
        $region42: #{conv_block_forward.3} parent=39 // pred_check_branch
          %381 = sbr.rel (%p379) target = $region44
        $region43: #{conv_block_forward.3} parent=39 // pred_region
          %s382 = ssub.s32 %s293, 1
          %p383 = scmp.gt.s32.totalorder %s382, 0
          %s384 = scalar_select %p383, %s382, 0
          %s385 = smul.u32 %s384, 2
          %s386 = smul.addr %s385, 4
          %s387 = scalar_lea.vmem %s280, %s386
          %v388 = vld [vmem:[%s387] sm:$0xf]
          %v389 = vld [vmem:[%s387 + $0x4] sm:$0xf]
          %v390 = vunpack.c.l.bf16 %v388
          %v391 = vunpack.c.l.bf16 %v389
          %392 = vst.msk [vmem:[#allocation2 + $0x1] sm:$0xff] %vm294, %v390
          %393 = vst.msk [vmem:[#allocation2 + $0x9] sm:$0xff] %vm294, %v391
        $region44: #{conv_block_forward.3} parent=39 // pred_fallthru
          _
        %p394 = scmp.lt.s32.totalorder %s25, 1
        // Predicated region
        $region45: #{conv_block_forward.3} parent=39 // pred_check
          %p395 = pneg %p394
        $region46: #{conv_block_forward.3} parent=39 // pred_check_branch
          %397 = sbr.rel (%p395) target = $region48
        $region47: #{conv_block_forward.3} parent=39 // pred_region
          %s398 = sadd.s32 %s293, 8
          %p399 = scmp.lt.s32.totalorder %s398, 15
          %s400 = scalar_select %p399, %s398, 15
          %s401 = smul.u32 %s400, 2
          %s402 = smul.addr %s401, 4
          %s403 = scalar_lea.vmem %s280, %s402
          %v404 = vld [vmem:[%s403] sm:$0xf]
          %v405 = vld [vmem:[%s403 + $0x4] sm:$0xf]
          %v406 = vunpack.c.l.bf16 %v404
          %v407 = vunpack.c.l.bf16 %v405
          %s408 = scalar_lea.vmem [#allocation2], 216
          %409 = vst.msk [vmem:[%s408 + $0x1] sm:$0xff] %vm294, %v406
          %410 = vst.msk [vmem:[%s408 + $0x9] sm:$0xff] %vm294, %v407
        $region48: #{conv_block_forward.3} parent=39 // pred_fallthru
          _
        %v411 = vld [vmem:[#allocation2] sm:$0xff]
        %v412 = vld [vmem:[#allocation2 + $0x8] sm:$0xff]
        %v413 = vld [vmem:[#allocation2 + $0x10] sm:$0x3]
        %v414 = vld [vmem:[#allocation2 + $0x18] sm:$0xff]
        %v415 = vld [vmem:[#allocation2 + $0x20] sm:$0xff]
        %v416 = vld [vmem:[#allocation2 + $0x28] sm:$0x3]
        %v417 = vld [vmem:[#allocation2 + $0x30] sm:$0xff]
        %v418 = vld [vmem:[#allocation2 + $0x38] sm:$0xff]
        %v419 = vld [vmem:[#allocation2 + $0x40] sm:$0x3]
        %v420 = vld [vmem:[#allocation2 + $0x48] sm:$0xff]
        %v421 = vld [vmem:[#allocation2 + $0x50] sm:$0xff]
        %v422 = vld [vmem:[#allocation2 + $0x58] sm:$0x3]
        %v423 = vld [vmem:[#allocation2 + $0x60] sm:$0xff]
        %v424 = vld [vmem:[#allocation2 + $0x68] sm:$0xff]
        %v425 = vld [vmem:[#allocation2 + $0x70] sm:$0x3]
        %v426 = vld [vmem:[#allocation2 + $0x78] sm:$0xff]
        %v427 = vld [vmem:[#allocation2 + $0x80] sm:$0xff]
        %v428 = vld [vmem:[#allocation2 + $0x88] sm:$0x3]
        %v429 = vld [vmem:[#allocation2 + $0x90] sm:$0xff]
        %v430 = vld [vmem:[#allocation2 + $0x98] sm:$0xff]
        %v431 = vld [vmem:[#allocation2 + $0xa0] sm:$0x3]
        %v432 = vld [vmem:[#allocation2 + $0xa8] sm:$0xff]
        %v433 = vld [vmem:[#allocation2 + $0xb0] sm:$0xff]
        %v434 = vld [vmem:[#allocation2 + $0xb8] sm:$0x3]
        %v435 = vld [vmem:[#allocation2 + $0xc0] sm:$0xff]
        %v436 = vld [vmem:[#allocation2 + $0xc8] sm:$0xff]
        %v437 = vld [vmem:[#allocation2 + $0xd0] sm:$0x3]
        %v438 = vld [vmem:[#allocation2 + $0xd8] sm:$0xff]
        %v439 = vld [vmem:[#allocation2 + $0xe0] sm:$0xff]
        %v440 = vld [vmem:[#allocation2 + $0xe8] sm:$0x3]
        %vm465 = vcmask 1046528
        %v466 = vrot.slane %v411, 1
        %v467 = vrot.slane %v412, 1
        %v468 = vsel %vm465, %v466, %v467
        %v469 = vrot.slane %v413, 1
        %v470 = vsel %vm465, %v467, %v469
        %v471 = vrot.slane %v414, 1
        %v472 = vrot.slane %v415, 1
        %v473 = vsel %vm465, %v471, %v472
        %v474 = vrot.slane %v416, 1
        %v475 = vsel %vm465, %v472, %v474
        %v476 = vrot.slane %v417, 1
        %v477 = vrot.slane %v418, 1
        %v478 = vsel %vm465, %v476, %v477
        %v479 = vrot.slane %v419, 1
        %v480 = vsel %vm465, %v477, %v479
        %v481 = vrot.slane %v420, 1
        %v482 = vrot.slane %v421, 1
        %v483 = vsel %vm465, %v481, %v482
        %v484 = vrot.slane %v422, 1
        %v485 = vsel %vm465, %v482, %v484
        %v486 = vrot.slane %v423, 1
        %v487 = vrot.slane %v424, 1
        %v488 = vsel %vm465, %v486, %v487
        %v489 = vrot.slane %v425, 1
        %v490 = vsel %vm465, %v487, %v489
        %v491 = vrot.slane %v426, 1
        %v492 = vrot.slane %v427, 1
        %v493 = vsel %vm465, %v491, %v492
        %v494 = vrot.slane %v428, 1
        %v495 = vsel %vm465, %v492, %v494
        %v496 = vrot.slane %v429, 1
        %v497 = vrot.slane %v430, 1
        %v498 = vsel %vm465, %v496, %v497
        %v499 = vrot.slane %v431, 1
        %v500 = vsel %vm465, %v497, %v499
        %v501 = vrot.slane %v432, 1
        %v502 = vrot.slane %v433, 1
        %v503 = vsel %vm465, %v501, %v502
        %v504 = vrot.slane %v434, 1
        %v505 = vsel %vm465, %v502, %v504
        %506 = vrot.lane.b32.xlu0 %v468, 16
        %v507 = vpop.permute.xlu0 %506
        %508 = vrot.lane.b32.xlu0 %v470, 16
        %v509 = vpop.permute.xlu0 %508
        %510 = vrot.lane.b32.xlu0 %v473, 16
        %v511 = vpop.permute.xlu0 %510
        %512 = vrot.lane.b32.xlu0 %v475, 16
        %v513 = vpop.permute.xlu0 %512
        %514 = vrot.lane.b32.xlu0 %v478, 16
        %v515 = vpop.permute.xlu0 %514
        %516 = vrot.lane.b32.xlu0 %v480, 16
        %v517 = vpop.permute.xlu0 %516
        %518 = vrot.lane.b32.xlu0 %v483, 16
        %v519 = vpop.permute.xlu0 %518
        %520 = vrot.lane.b32.xlu0 %v485, 16
        %v521 = vpop.permute.xlu0 %520
        %522 = vrot.lane.b32.xlu0 %v488, 16
        %v523 = vpop.permute.xlu0 %522
        %524 = vrot.lane.b32.xlu0 %v490, 16
        %v525 = vpop.permute.xlu0 %524
        %526 = vrot.lane.b32.xlu0 %v493, 16
        %v527 = vpop.permute.xlu0 %526
        %528 = vrot.lane.b32.xlu0 %v495, 16
        %v529 = vpop.permute.xlu0 %528
        %530 = vrot.lane.b32.xlu0 %v498, 16
        %v531 = vpop.permute.xlu0 %530
        %532 = vrot.lane.b32.xlu0 %v500, 16
        %v533 = vpop.permute.xlu0 %532
        %534 = vrot.lane.b32.xlu0 %v503, 16
        %v535 = vpop.permute.xlu0 %534
        %536 = vrot.lane.b32.xlu0 %v505, 16
        %v537 = vpop.permute.xlu0 %536
        %vm554 = vcmask 1045504
        %v555 = vrot.slane %v411, 2
        %v556 = vrot.slane %v412, 2
        %v557 = vsel %vm554, %v555, %v556
        %v558 = vrot.slane %v413, 2
        %v559 = vsel %vm554, %v556, %v558
        %v560 = vrot.slane %v414, 2
        %v561 = vrot.slane %v415, 2
        %v562 = vsel %vm554, %v560, %v561
        %v563 = vrot.slane %v416, 2
        %v564 = vsel %vm554, %v561, %v563
        %v565 = vrot.slane %v417, 2
        %v566 = vrot.slane %v418, 2
        %v567 = vsel %vm554, %v565, %v566
        %v568 = vrot.slane %v419, 2
        %v569 = vsel %vm554, %v566, %v568
        %v570 = vrot.slane %v420, 2
        %v571 = vrot.slane %v421, 2
        %v572 = vsel %vm554, %v570, %v571
        %v573 = vrot.slane %v422, 2
        %v574 = vsel %vm554, %v571, %v573
        %v575 = vrot.slane %v423, 2
        %v576 = vrot.slane %v424, 2
        %v577 = vsel %vm554, %v575, %v576
        %v578 = vrot.slane %v425, 2
        %v579 = vsel %vm554, %v576, %v578
        %v580 = vrot.slane %v426, 2
        %v581 = vrot.slane %v427, 2
        %v582 = vsel %vm554, %v580, %v581
        %v583 = vrot.slane %v428, 2
        %v584 = vsel %vm554, %v581, %v583
        %v585 = vrot.slane %v429, 2
        %v586 = vrot.slane %v430, 2
        %v587 = vsel %vm554, %v585, %v586
        %v588 = vrot.slane %v431, 2
        %v589 = vsel %vm554, %v586, %v588
        %v590 = vrot.slane %v432, 2
        %v591 = vrot.slane %v433, 2
        %v592 = vsel %vm554, %v590, %v591
        %v593 = vrot.slane %v434, 2
        %v594 = vsel %vm554, %v591, %v593
        %595 = vrot.lane.b32.xlu0 %v557, 32
        %v596 = vpop.permute.xlu0 %595
        %597 = vrot.lane.b32.xlu0 %v559, 32
        %v598 = vpop.permute.xlu0 %597
        %599 = vrot.lane.b32.xlu0 %v562, 32
        %v600 = vpop.permute.xlu0 %599
        %601 = vrot.lane.b32.xlu0 %v564, 32
        %v602 = vpop.permute.xlu0 %601
        %603 = vrot.lane.b32.xlu0 %v567, 32
        %v604 = vpop.permute.xlu0 %603
        %605 = vrot.lane.b32.xlu0 %v569, 32
        %v606 = vpop.permute.xlu0 %605
        %607 = vrot.lane.b32.xlu0 %v572, 32
        %v608 = vpop.permute.xlu0 %607
        %609 = vrot.lane.b32.xlu0 %v574, 32
        %v610 = vpop.permute.xlu0 %609
        %611 = vrot.lane.b32.xlu0 %v577, 32
        %v612 = vpop.permute.xlu0 %611
        %613 = vrot.lane.b32.xlu0 %v579, 32
        %v614 = vpop.permute.xlu0 %613
        %615 = vrot.lane.b32.xlu0 %v582, 32
        %v616 = vpop.permute.xlu0 %615
        %617 = vrot.lane.b32.xlu0 %v584, 32
        %v618 = vpop.permute.xlu0 %617
        %619 = vrot.lane.b32.xlu0 %v587, 32
        %v620 = vpop.permute.xlu0 %619
        %621 = vrot.lane.b32.xlu0 %v589, 32
        %v622 = vpop.permute.xlu0 %621
        %623 = vrot.lane.b32.xlu0 %v592, 32
        %v624 = vpop.permute.xlu0 %623
        %625 = vrot.lane.b32.xlu0 %v594, 32
        %v626 = vpop.permute.xlu0 %625
        %645 = vrot.lane.b32.xlu0 %v414, 48
        %v646 = vpop.permute.xlu0 %645
        %647 = vrot.lane.b32.xlu0 %v415, 48
        %v648 = vpop.permute.xlu0 %647
        %649 = vrot.lane.b32.xlu0 %v417, 48
        %v650 = vpop.permute.xlu0 %649
        %651 = vrot.lane.b32.xlu0 %v418, 48
        %v652 = vpop.permute.xlu0 %651
        %653 = vrot.lane.b32.xlu0 %v420, 48
        %v654 = vpop.permute.xlu0 %653
        %655 = vrot.lane.b32.xlu0 %v421, 48
        %v656 = vpop.permute.xlu0 %655
        %657 = vrot.lane.b32.xlu0 %v423, 48
        %v658 = vpop.permute.xlu0 %657
        %659 = vrot.lane.b32.xlu0 %v424, 48
        %v660 = vpop.permute.xlu0 %659
        %661 = vrot.lane.b32.xlu0 %v426, 48
        %v662 = vpop.permute.xlu0 %661
        %663 = vrot.lane.b32.xlu0 %v427, 48
        %v664 = vpop.permute.xlu0 %663
        %665 = vrot.lane.b32.xlu0 %v429, 48
        %v666 = vpop.permute.xlu0 %665
        %667 = vrot.lane.b32.xlu0 %v430, 48
        %v668 = vpop.permute.xlu0 %667
        %669 = vrot.lane.b32.xlu0 %v432, 48
        %v670 = vpop.permute.xlu0 %669
        %671 = vrot.lane.b32.xlu0 %v433, 48
        %v672 = vpop.permute.xlu0 %671
        %673 = vrot.lane.b32.xlu0 %v435, 48
        %v674 = vpop.permute.xlu0 %673
        %675 = vrot.lane.b32.xlu0 %v436, 48
        %v676 = vpop.permute.xlu0 %675
        %v694 = vrot.slane %v435, 1
        %v695 = vrot.slane %v436, 1
        %v696 = vsel %vm465, %v694, %v695
        %v697 = vrot.slane %v437, 1
        %v698 = vsel %vm465, %v695, %v697
        %699 = vrot.lane.b32.xlu0 %v473, 64
        %v700 = vpop.permute.xlu0 %699
        %701 = vrot.lane.b32.xlu0 %v475, 64
        %v702 = vpop.permute.xlu0 %701
        %703 = vrot.lane.b32.xlu0 %v478, 64
        %v704 = vpop.permute.xlu0 %703
        %705 = vrot.lane.b32.xlu0 %v480, 64
        %v706 = vpop.permute.xlu0 %705
        %707 = vrot.lane.b32.xlu0 %v483, 64
        %v708 = vpop.permute.xlu0 %707
        %709 = vrot.lane.b32.xlu0 %v485, 64
        %v710 = vpop.permute.xlu0 %709
        %711 = vrot.lane.b32.xlu0 %v488, 64
        %v712 = vpop.permute.xlu0 %711
        %713 = vrot.lane.b32.xlu0 %v490, 64
        %v714 = vpop.permute.xlu0 %713
        %715 = vrot.lane.b32.xlu0 %v493, 64
        %v716 = vpop.permute.xlu0 %715
        %717 = vrot.lane.b32.xlu0 %v495, 64
        %v718 = vpop.permute.xlu0 %717
        %719 = vrot.lane.b32.xlu0 %v498, 64
        %v720 = vpop.permute.xlu0 %719
        %721 = vrot.lane.b32.xlu0 %v500, 64
        %v722 = vpop.permute.xlu0 %721
        %723 = vrot.lane.b32.xlu0 %v503, 64
        %v724 = vpop.permute.xlu0 %723
        %725 = vrot.lane.b32.xlu0 %v505, 64
        %v726 = vpop.permute.xlu0 %725
        %727 = vrot.lane.b32.xlu0 %v696, 64
        %v728 = vpop.permute.xlu0 %727
        %729 = vrot.lane.b32.xlu0 %v698, 64
        %v730 = vpop.permute.xlu0 %729
        %v747 = vrot.slane %v435, 2
        %v748 = vrot.slane %v436, 2
        %v749 = vsel %vm554, %v747, %v748
        %v750 = vrot.slane %v437, 2
        %v751 = vsel %vm554, %v748, %v750
        %752 = vrot.lane.b32.xlu0 %v562, 80
        %v753 = vpop.permute.xlu0 %752
        %754 = vrot.lane.b32.xlu0 %v564, 80
        %v755 = vpop.permute.xlu0 %754
        %756 = vrot.lane.b32.xlu0 %v567, 80
        %v757 = vpop.permute.xlu0 %756
        %758 = vrot.lane.b32.xlu0 %v569, 80
        %v759 = vpop.permute.xlu0 %758
        %760 = vrot.lane.b32.xlu0 %v572, 80
        %v761 = vpop.permute.xlu0 %760
        %762 = vrot.lane.b32.xlu0 %v574, 80
        %v763 = vpop.permute.xlu0 %762
        %764 = vrot.lane.b32.xlu0 %v577, 80
        %v765 = vpop.permute.xlu0 %764
        %766 = vrot.lane.b32.xlu0 %v579, 80
        %v767 = vpop.permute.xlu0 %766
        %768 = vrot.lane.b32.xlu0 %v582, 80
        %v769 = vpop.permute.xlu0 %768
        %770 = vrot.lane.b32.xlu0 %v584, 80
        %v771 = vpop.permute.xlu0 %770
        %772 = vrot.lane.b32.xlu0 %v587, 80
        %v773 = vpop.permute.xlu0 %772
        %774 = vrot.lane.b32.xlu0 %v589, 80
        %v775 = vpop.permute.xlu0 %774
        %776 = vrot.lane.b32.xlu0 %v592, 80
        %v777 = vpop.permute.xlu0 %776
        %778 = vrot.lane.b32.xlu0 %v594, 80
        %v779 = vpop.permute.xlu0 %778
        %780 = vrot.lane.b32.xlu0 %v749, 80
        %v781 = vpop.permute.xlu0 %780
        %782 = vrot.lane.b32.xlu0 %v751, 80
        %v783 = vpop.permute.xlu0 %782
        %802 = vrot.lane.b32.xlu0 %v417, 96
        %v803 = vpop.permute.xlu0 %802
        %804 = vrot.lane.b32.xlu0 %v418, 96
        %v805 = vpop.permute.xlu0 %804
        %806 = vrot.lane.b32.xlu0 %v420, 96
        %v807 = vpop.permute.xlu0 %806
        %808 = vrot.lane.b32.xlu0 %v421, 96
        %v809 = vpop.permute.xlu0 %808
        %810 = vrot.lane.b32.xlu0 %v423, 96
        %v811 = vpop.permute.xlu0 %810
        %812 = vrot.lane.b32.xlu0 %v424, 96
        %v813 = vpop.permute.xlu0 %812
        %814 = vrot.lane.b32.xlu0 %v426, 96
        %v815 = vpop.permute.xlu0 %814
        %816 = vrot.lane.b32.xlu0 %v427, 96
        %v817 = vpop.permute.xlu0 %816
        %818 = vrot.lane.b32.xlu0 %v429, 96
        %v819 = vpop.permute.xlu0 %818
        %820 = vrot.lane.b32.xlu0 %v430, 96
        %v821 = vpop.permute.xlu0 %820
        %822 = vrot.lane.b32.xlu0 %v432, 96
        %v823 = vpop.permute.xlu0 %822
        %824 = vrot.lane.b32.xlu0 %v433, 96
        %v825 = vpop.permute.xlu0 %824
        %826 = vrot.lane.b32.xlu0 %v435, 96
        %v827 = vpop.permute.xlu0 %826
        %828 = vrot.lane.b32.xlu0 %v436, 96
        %v829 = vpop.permute.xlu0 %828
        %830 = vrot.lane.b32.xlu0 %v438, 96
        %v831 = vpop.permute.xlu0 %830
        %832 = vrot.lane.b32.xlu0 %v439, 96
        %v833 = vpop.permute.xlu0 %832
        %v851 = vrot.slane %v438, 1
        %v852 = vrot.slane %v439, 1
        %v853 = vsel %vm465, %v851, %v852
        %v854 = vrot.slane %v440, 1
        %v855 = vsel %vm465, %v852, %v854
        %856 = vrot.lane.b32.xlu0 %v478, 112
        %v857 = vpop.permute.xlu0 %856
        %858 = vrot.lane.b32.xlu0 %v480, 112
        %v859 = vpop.permute.xlu0 %858
        %860 = vrot.lane.b32.xlu0 %v483, 112
        %v861 = vpop.permute.xlu0 %860
        %862 = vrot.lane.b32.xlu0 %v485, 112
        %v863 = vpop.permute.xlu0 %862
        %864 = vrot.lane.b32.xlu0 %v488, 112
        %v865 = vpop.permute.xlu0 %864
        %866 = vrot.lane.b32.xlu0 %v490, 112
        %v867 = vpop.permute.xlu0 %866
        %868 = vrot.lane.b32.xlu0 %v493, 112
        %v869 = vpop.permute.xlu0 %868
        %870 = vrot.lane.b32.xlu0 %v495, 112
        %v871 = vpop.permute.xlu0 %870
        %872 = vrot.lane.b32.xlu0 %v498, 112
        %v873 = vpop.permute.xlu0 %872
        %874 = vrot.lane.b32.xlu0 %v500, 112
        %v875 = vpop.permute.xlu0 %874
        %876 = vrot.lane.b32.xlu0 %v503, 112
        %v877 = vpop.permute.xlu0 %876
        %878 = vrot.lane.b32.xlu0 %v505, 112
        %v879 = vpop.permute.xlu0 %878
        %880 = vrot.lane.b32.xlu0 %v696, 112
        %v881 = vpop.permute.xlu0 %880
        %882 = vrot.lane.b32.xlu0 %v698, 112
        %v883 = vpop.permute.xlu0 %882
        %884 = vrot.lane.b32.xlu0 %v853, 112
        %v885 = vpop.permute.xlu0 %884
        %886 = vrot.lane.b32.xlu0 %v855, 112
        %v887 = vpop.permute.xlu0 %886
        %v904 = vrot.slane %v438, 2
        %v905 = vrot.slane %v439, 2
        %v906 = vsel %vm554, %v904, %v905
        %v907 = vrot.slane %v440, 2
        %v908 = vsel %vm554, %v905, %v907
        %v925 = vsel %vm294, %v411, %v507
        %v926 = vsel %vm294, %v412, %v509
        %v927 = vsel %vm294, %v414, %v511
        %v928 = vsel %vm294, %v415, %v513
        %v929 = vsel %vm294, %v417, %v515
        %v930 = vsel %vm294, %v418, %v517
        %v931 = vsel %vm294, %v420, %v519
        %v932 = vsel %vm294, %v421, %v521
        %v933 = vsel %vm294, %v423, %v523
        %v934 = vsel %vm294, %v424, %v525
        %v935 = vsel %vm294, %v426, %v527
        %v936 = vsel %vm294, %v427, %v529
        %v937 = vsel %vm294, %v429, %v531
        %v938 = vsel %vm294, %v430, %v533
        %v939 = vsel %vm294, %v432, %v535
        %v940 = vsel %vm294, %v433, %v537
        %vm941 = vcmask 261120
        %v942 = vsel %vm941, %v925, %v596
        %v943 = vsel %vm941, %v926, %v598
        %v944 = vsel %vm941, %v927, %v600
        %v945 = vsel %vm941, %v928, %v602
        %v946 = vsel %vm941, %v929, %v604
        %v947 = vsel %vm941, %v930, %v606
        %v948 = vsel %vm941, %v931, %v608
        %v949 = vsel %vm941, %v932, %v610
        %v950 = vsel %vm941, %v933, %v612
        %v951 = vsel %vm941, %v934, %v614
        %v952 = vsel %vm941, %v935, %v616
        %v953 = vsel %vm941, %v936, %v618
        %v954 = vsel %vm941, %v937, %v620
        %v955 = vsel %vm941, %v938, %v622
        %v956 = vsel %vm941, %v939, %v624
        %v957 = vsel %vm941, %v940, %v626
        %vm958 = vcmask 392192
        %v959 = vsel %vm958, %v942, %v646
        %v960 = vsel %vm958, %v943, %v648
        %v961 = vsel %vm958, %v944, %v650
        %v962 = vsel %vm958, %v945, %v652
        %v963 = vsel %vm958, %v946, %v654
        %v964 = vsel %vm958, %v947, %v656
        %v965 = vsel %vm958, %v948, %v658
        %v966 = vsel %vm958, %v949, %v660
        %v967 = vsel %vm958, %v950, %v662
        %v968 = vsel %vm958, %v951, %v664
        %v969 = vsel %vm958, %v952, %v666
        %v970 = vsel %vm958, %v953, %v668
        %v971 = vsel %vm958, %v954, %v670
        %v972 = vsel %vm958, %v955, %v672
        %v973 = vsel %vm958, %v956, %v674
        %v974 = vsel %vm958, %v957, %v676
        %vm975 = vcmask 523264
        %v976 = vsel %vm975, %v959, %v700
        %v977 = vsel %vm975, %v960, %v702
        %v978 = vsel %vm975, %v961, %v704
        %v979 = vsel %vm975, %v962, %v706
        %v980 = vsel %vm975, %v963, %v708
        %v981 = vsel %vm975, %v964, %v710
        %v982 = vsel %vm975, %v965, %v712
        %v983 = vsel %vm975, %v966, %v714
        %v984 = vsel %vm975, %v967, %v716
        %v985 = vsel %vm975, %v968, %v718
        %v986 = vsel %vm975, %v969, %v720
        %v987 = vsel %vm975, %v970, %v722
        %v988 = vsel %vm975, %v971, %v724
        %v989 = vsel %vm975, %v972, %v726
        %v990 = vsel %vm975, %v973, %v728
        %v991 = vsel %vm975, %v974, %v730
        %vm992 = vcmask 654336
        %v993 = vsel %vm992, %v976, %v753
        %v994 = vsel %vm992, %v977, %v755
        %v995 = vsel %vm992, %v978, %v757
        %v996 = vsel %vm992, %v979, %v759
        %v997 = vsel %vm992, %v980, %v761
        %v998 = vsel %vm992, %v981, %v763
        %v999 = vsel %vm992, %v982, %v765
        %v1000 = vsel %vm992, %v983, %v767
        %v1001 = vsel %vm992, %v984, %v769
        %v1002 = vsel %vm992, %v985, %v771
        %v1003 = vsel %vm992, %v986, %v773
        %v1004 = vsel %vm992, %v987, %v775
        %v1005 = vsel %vm992, %v988, %v777
        %v1006 = vsel %vm992, %v989, %v779
        %v1007 = vsel %vm992, %v990, %v781
        %v1008 = vsel %vm992, %v991, %v783
        %vm1009 = vcmask 785408
        %v1010 = vsel %vm1009, %v993, %v803
        %v1011 = vsel %vm1009, %v994, %v805
        %v1012 = vsel %vm1009, %v995, %v807
        %v1013 = vsel %vm1009, %v996, %v809
        %v1014 = vsel %vm1009, %v997, %v811
        %v1015 = vsel %vm1009, %v998, %v813
        %v1016 = vsel %vm1009, %v999, %v815
        %v1017 = vsel %vm1009, %v1000, %v817
        %v1018 = vsel %vm1009, %v1001, %v819
        %v1019 = vsel %vm1009, %v1002, %v821
        %v1020 = vsel %vm1009, %v1003, %v823
        %v1021 = vsel %vm1009, %v1004, %v825
        %v1022 = vsel %vm1009, %v1005, %v827
        %v1023 = vsel %vm1009, %v1006, %v829
        %v1024 = vsel %vm1009, %v1007, %v831
        %v1025 = vsel %vm1009, %v1008, %v833
        %vm1026 = vcmask 916480
        %v1027 = vsel %vm1026, %v1010, %v857
        %v1028 = vsel %vm1026, %v1011, %v859
        %v1029 = vsel %vm1026, %v1012, %v861
        %v1030 = vsel %vm1026, %v1013, %v863
        %v1031 = vsel %vm1026, %v1014, %v865
        %v1032 = vsel %vm1026, %v1015, %v867
        %v1033 = vsel %vm1026, %v1016, %v869
        %v1034 = vsel %vm1026, %v1017, %v871
        %v1035 = vsel %vm1026, %v1018, %v873
        %v1036 = vsel %vm1026, %v1019, %v875
        %v1037 = vsel %vm1026, %v1020, %v877
        %v1038 = vsel %vm1026, %v1021, %v879
        %v1039 = vsel %vm1026, %v1022, %v881
        %v1040 = vsel %vm1026, %v1023, %v883
        %v1041 = vsel %vm1026, %v1024, %v885
        %v1042 = vsel %vm1026, %v1025, %v887
        %v1043 = vpack.c.bf16 %v1028, %v1027
        %v1044 = vpack.c.bf16 %v569, %v567
        %v1045 = vpack.c.bf16 %v1030, %v1029
        %v1046 = vpack.c.bf16 %v574, %v572
        %v1047 = vpack.c.bf16 %v1032, %v1031
        %v1048 = vpack.c.bf16 %v579, %v577
        %v1049 = vpack.c.bf16 %v1034, %v1033
        %v1050 = vpack.c.bf16 %v584, %v582
        %v1051 = vpack.c.bf16 %v1036, %v1035
        %v1052 = vpack.c.bf16 %v589, %v587
        %v1053 = vpack.c.bf16 %v1038, %v1037
        %v1054 = vpack.c.bf16 %v594, %v592
        %v1055 = vpack.c.bf16 %v1040, %v1039
        %v1056 = vpack.c.bf16 %v751, %v749
        %v1057 = vpack.c.bf16 %v1042, %v1041
        %v1058 = vpack.c.bf16 %v908, %v906
        %v1059 = vld [vmem:[%s284] sm:$0xf]
        %v1060 = vld [vmem:[%s284 + $0x4] sm:$0xf]
        %v1061 = vld [vmem:[%s284 + $0x8] sm:$0xf]
        %v1062 = vld [vmem:[%s284 + $0xc] sm:$0xf]
        %v1063 = vld [vmem:[%s284 + $0x10] sm:$0xf]
        %v1064 = vld [vmem:[%s284 + $0x14] sm:$0xf]
        %v1065 = vld [vmem:[%s284 + $0x18] sm:$0xf]
        %v1066 = vld [vmem:[%s284 + $0x1c] sm:$0xf]
        %v1067 = vld [vmem:[%s284 + $0x20] sm:$0xf]
        %v1068 = vld [vmem:[%s284 + $0x24] sm:$0xf]
        %v1069 = vld [vmem:[%s284 + $0x28] sm:$0xf]
        %v1070 = vld [vmem:[%s284 + $0x2c] sm:$0xf]
        %v1071 = vld [vmem:[%s284 + $0x30] sm:$0xf]
        %v1072 = vld [vmem:[%s284 + $0x34] sm:$0xf]
        %v1073 = vld [vmem:[%s284 + $0x38] sm:$0xf]
        %v1074 = vld [vmem:[%s284 + $0x3c] sm:$0xf]
        %v1075 = vld [vmem:[%s284 + $0x40] sm:$0xf]
        %v1076 = vld [vmem:[%s284 + $0x44] sm:$0xf]
        %v1095 = vunpack.c.l.b16 %v1059
        %v1096 = vunpack.c.l.b16 %v1060
        %v1097 = vunpack.c.l.b16 %v1061
        %v1098 = vunpack.c.l.b16 %v1062
        %v1099 = vunpack.c.l.b16 %v1063
        %v1100 = vunpack.c.l.b16 %v1064
        %v1101 = vunpack.c.l.b16 %v1065
        %v1102 = vunpack.c.l.b16 %v1066
        %v1103 = vunpack.c.l.b16 %v1067
        %v1104 = vunpack.c.l.b16 %v1068
        %v1105 = vunpack.c.l.b16 %v1069
        %v1106 = vunpack.c.l.b16 %v1070
        %v1107 = vunpack.c.l.b16 %v1071
        %v1108 = vunpack.c.l.b16 %v1072
        %v1109 = vunpack.c.l.b16 %v1073
        %v1110 = vunpack.c.l.b16 %v1074
        %v1111 = vunpack.c.l.b16 %v1075
        %v1112 = vunpack.c.l.b16 %v1076
        %v1113 = vpack.c.b16 %v1096, %v1095
        %v1114 = vpack.c.b16 %v1098, %v1097
        %v1115 = vpack.c.b16 %v1100, %v1099
        %v1116 = vpack.c.b16 %v1102, %v1101
        %v1117 = vpack.c.b16 %v1104, %v1103
        %v1118 = vpack.c.b16 %v1106, %v1105
        %v1119 = vpack.c.b16 %v1108, %v1107
        %v1120 = vpack.c.b16 %v1110, %v1109
        %v1121 = vpack.c.b16 %v1112, %v1111
        %v1132 = vsel %vm294, %v1044, 0
        %v1135 = vsel %vm294, %v1046, 0
        %v1138 = vsel %vm294, %v1048, 0
        %v1141 = vsel %vm294, %v1050, 0
        %v1144 = vsel %vm294, %v1052, 0
        %v1147 = vsel %vm294, %v1054, 0
        %v1150 = vsel %vm294, %v1056, 0
        %v1153 = vsel %vm294, %v1058, 0
        %1155 = vmatpush.bf16.msra.mxu0 %v1120
        %1156 = vmatpush.bf16.msra.mxu0 %v1119
        %1157 = vmatpush.bf16.msra.mxu0 %v1118
        %1158 = vmatpush.bf16.msra.mxu0 %v1117
        %1159 = vmatpush.bf16.msra.mxu0 %v1116
        %1160 = vmatpush.bf16.msra.mxu0 %v1115
        %1161 = vmatpush.bf16.msra.mxu0 %v1114
        %1162 = vmatpush.bf16.msra.mxu0 %v1113
        %1163 = vmatmul.bf16.gmra.mxu0 %v1043
        %v1164 = vpop.f32.mrf.mxu0
        %v1165 = vadd.f32 0.0, %v1164
        %v1166 = vpop.f32.mrf.mxu0
        %v1167 = vadd.f32 0.0, %v1166
        %1168 = vmatmul.bf16.gmra.mxu0 %v1045
        %v1169 = vpop.f32.mrf.mxu0
        %v1170 = vadd.f32 0.0, %v1169
        %v1171 = vpop.f32.mrf.mxu0
        %v1172 = vadd.f32 0.0, %v1171
        %1173 = vmatmul.bf16.gmra.mxu0 %v1047
        %v1174 = vpop.f32.mrf.mxu0
        %v1175 = vadd.f32 0.0, %v1174
        %v1176 = vpop.f32.mrf.mxu0
        %v1177 = vadd.f32 0.0, %v1176
        %1178 = vmatmul.bf16.gmra.mxu0 %v1049
        %v1179 = vpop.f32.mrf.mxu0
        %v1180 = vadd.f32 0.0, %v1179
        %v1181 = vpop.f32.mrf.mxu0
        %v1182 = vadd.f32 0.0, %v1181
        %1183 = vmatmul.bf16.gmra.mxu0 %v1051
        %v1184 = vpop.f32.mrf.mxu0
        %v1185 = vadd.f32 0.0, %v1184
        %v1186 = vpop.f32.mrf.mxu0
        %v1187 = vadd.f32 0.0, %v1186
        %1188 = vmatmul.bf16.gmra.mxu0 %v1053
        %v1189 = vpop.f32.mrf.mxu0
        %v1190 = vadd.f32 0.0, %v1189
        %v1191 = vpop.f32.mrf.mxu0
        %v1192 = vadd.f32 0.0, %v1191
        %1193 = vmatmul.bf16.gmra.mxu0 %v1055
        %v1194 = vpop.f32.mrf.mxu0
        %v1195 = vadd.f32 0.0, %v1194
        %v1196 = vpop.f32.mrf.mxu0
        %v1197 = vadd.f32 0.0, %v1196
        %1198 = vmatmul.bf16.gmra.mxu0 %v1057
        %v1199 = vpop.f32.mrf.mxu0
        %v1200 = vadd.f32 0.0, %v1199
        %v1201 = vpop.f32.mrf.mxu0
        %v1202 = vadd.f32 0.0, %v1201
        %1203 = vdwg.mxu0
        %1204 = vmatpush.bf16.msra.mxu0 0
        %1205 = vmatpush.bf16.msra.mxu0 0
        %1206 = vmatpush.bf16.msra.mxu0 0
        %1207 = vmatpush.bf16.msra.mxu0 0
        %1208 = vmatpush.bf16.msra.mxu0 0
        %1209 = vmatpush.bf16.msra.mxu0 0
        %1210 = vmatpush.bf16.msra.mxu0 0
        %1211 = vmatpush.bf16.msra.mxu0 %v1121
        %1212 = vmatmul.bf16.gmra.mxu0 %v1132
        %v1213 = vpop.f32.mrf.mxu0
        %v1214 = vadd.f32 %v1165, %v1213
        %v1215 = vpop.f32.mrf.mxu0
        %v1216 = vadd.f32 %v1167, %v1215
        %1217 = vmatmul.bf16.gmra.mxu0 %v1135
        %v1218 = vpop.f32.mrf.mxu0
        %v1219 = vadd.f32 %v1170, %v1218
        %v1220 = vpop.f32.mrf.mxu0
        %v1221 = vadd.f32 %v1172, %v1220
        %1222 = vmatmul.bf16.gmra.mxu0 %v1138
        %v1223 = vpop.f32.mrf.mxu0
        %v1224 = vadd.f32 %v1175, %v1223
        %v1225 = vpop.f32.mrf.mxu0
        %v1226 = vadd.f32 %v1177, %v1225
        %1227 = vmatmul.bf16.gmra.mxu0 %v1141
        %v1228 = vpop.f32.mrf.mxu0
        %v1229 = vadd.f32 %v1180, %v1228
        %v1230 = vpop.f32.mrf.mxu0
        %v1231 = vadd.f32 %v1182, %v1230
        %1232 = vmatmul.bf16.gmra.mxu0 %v1144
        %v1233 = vpop.f32.mrf.mxu0
        %v1234 = vadd.f32 %v1185, %v1233
        %v1235 = vpop.f32.mrf.mxu0
        %v1236 = vadd.f32 %v1187, %v1235
        %1237 = vmatmul.bf16.gmra.mxu0 %v1147
        %v1238 = vpop.f32.mrf.mxu0
        %v1239 = vadd.f32 %v1190, %v1238
        %v1240 = vpop.f32.mrf.mxu0
        %v1241 = vadd.f32 %v1192, %v1240
        %1242 = vmatmul.bf16.gmra.mxu0 %v1150
        %v1243 = vpop.f32.mrf.mxu0
        %v1244 = vadd.f32 %v1195, %v1243
        %v1245 = vpop.f32.mrf.mxu0
        %v1246 = vadd.f32 %v1197, %v1245
        %1247 = vmatmul.bf16.gmra.mxu0 %v1153
        %v1248 = vpop.f32.mrf.mxu0
        %v1249 = vadd.f32 %v1200, %v1248
        %v1250 = vpop.f32.mrf.mxu0
        %v1251 = vadd.f32 %v1202, %v1250
        %1252 = vdwg.mxu0
        %v1253 = vld [vmem:[%s287] sm:$0x1]
        %v1255 = vperm.slane %v1253, 0
        %v1257 = vmul.f32 %v1214, %v1255
        %v1258 = vmul.f32 %v1216, %v1255
        %v1259 = vmul.f32 %v1219, %v1255
        %v1260 = vmul.f32 %v1221, %v1255
        %v1261 = vmul.f32 %v1224, %v1255
        %v1262 = vmul.f32 %v1226, %v1255
        %v1263 = vmul.f32 %v1229, %v1255
        %v1264 = vmul.f32 %v1231, %v1255
        %v1265 = vmul.f32 %v1234, %v1255
        %v1266 = vmul.f32 %v1236, %v1255
        %v1267 = vmul.f32 %v1239, %v1255
        %v1268 = vmul.f32 %v1241, %v1255
        %v1269 = vmul.f32 %v1244, %v1255
        %v1270 = vmul.f32 %v1246, %v1255
        %v1271 = vmul.f32 %v1249, %v1255
        %v1272 = vmul.f32 %v1251, %v1255
        %v1273 = vld [vmem:[%s290] sm:$0x1]
        %v1275 = vperm.slane %v1273, 0
        %v1277 = vadd.f32 %v1257, %v1275
        %v1278 = vadd.f32 %v1258, %v1275
        %v1279 = vadd.f32 %v1259, %v1275
        %v1280 = vadd.f32 %v1260, %v1275
        %v1281 = vadd.f32 %v1261, %v1275
        %v1282 = vadd.f32 %v1262, %v1275
        %v1283 = vadd.f32 %v1263, %v1275
        %v1284 = vadd.f32 %v1264, %v1275
        %v1285 = vadd.f32 %v1265, %v1275
        %v1286 = vadd.f32 %v1266, %v1275
        %v1287 = vadd.f32 %v1267, %v1275
        %v1288 = vadd.f32 %v1268, %v1275
        %v1289 = vadd.f32 %v1269, %v1275
        %v1290 = vadd.f32 %v1270, %v1275
        %v1291 = vadd.f32 %v1271, %v1275
        %v1292 = vadd.f32 %v1272, %v1275
        %v1293 = vmax.f32 %v1277, 0.0
        %v1294 = vmax.f32 %v1278, 0.0
        %v1295 = vmax.f32 %v1279, 0.0
        %v1296 = vmax.f32 %v1280, 0.0
        %v1297 = vmax.f32 %v1281, 0.0
        %v1298 = vmax.f32 %v1282, 0.0
        %v1299 = vmax.f32 %v1283, 0.0
        %v1300 = vmax.f32 %v1284, 0.0
        %v1301 = vmax.f32 %v1285, 0.0
        %v1302 = vmax.f32 %v1286, 0.0
        %v1303 = vmax.f32 %v1287, 0.0
        %v1304 = vmax.f32 %v1288, 0.0
        %v1305 = vmax.f32 %v1289, 0.0
        %v1306 = vmax.f32 %v1290, 0.0
        %v1307 = vmax.f32 %v1291, 0.0
        %v1308 = vmax.f32 %v1292, 0.0
        %v1309 = vld [vmem:[%s4] sm:$0xf]
        %v1310 = vld [vmem:[%s4 + $0x4] sm:$0xf]
        %v1311 = vld [vmem:[%s4 + $0x8] sm:$0xf]
        %v1312 = vld [vmem:[%s4 + $0xc] sm:$0xf]
        %v1313 = vpack.c.bf16 %v1294, %v1293
        %v1314 = vpack.c.bf16 %v1296, %v1295
        %v1315 = vpack.c.bf16 %v1298, %v1297
        %v1316 = vpack.c.bf16 %v1300, %v1299
        %v1317 = vpack.c.bf16 %v1302, %v1301
        %v1318 = vpack.c.bf16 %v1304, %v1303
        %v1319 = vpack.c.bf16 %v1306, %v1305
        %v1320 = vpack.c.bf16 %v1308, %v1307
        %v1325 = vunpack.c.l.b16 %v1309
        %v1326 = vunpack.c.l.b16 %v1310
        %v1327 = vunpack.c.l.b16 %v1311
        %v1328 = vunpack.c.l.b16 %v1312
        %v1329 = vpack.c.b16 %v1326, %v1325
        %v1330 = vpack.c.b16 %v1328, %v1327
        %1333 = vmatpush.bf16.msra.mxu0 %v1320
        %1334 = vmatpush.bf16.msra.mxu0 %v1319
        %1335 = vmatpush.bf16.msra.mxu0 %v1318
        %1336 = vmatpush.bf16.msra.mxu0 %v1317
        %1337 = vmatpush.bf16.msra.mxu0 %v1316
        %1338 = vmatpush.bf16.msra.mxu0 %v1315
        %1339 = vmatpush.bf16.msra.mxu0 %v1314
        %1340 = vmatpush.bf16.msra.mxu0 %v1313
        %1341 = vmatmul.bf16.gmra.mxu0 %v1329
        %v1342 = vpop.f32.mrf.mxu0
        %v1343 = vadd.f32 0.0, %v1342
        %v1344 = vpop.f32.mrf.mxu0
        %v1345 = vadd.f32 0.0, %v1344
        %1346 = vmatmul.bf16.gmra.mxu0 %v1330
        %v1347 = vpop.f32.mrf.mxu0
        %v1348 = vadd.f32 0.0, %v1347
        %v1349 = vpop.f32.mrf.mxu0
        %v1350 = vadd.f32 0.0, %v1349
        %1351 = vdwg.mxu0
        %v1352 = vmul.f32 %v1343, 0.25
        %v1353 = vmul.f32 %v1345, 0.25
        %v1354 = vmul.f32 %v1348, 0.25
        %v1355 = vmul.f32 %v1350, 0.25
        %1356 = vst.msk [vmem:[%s275] sm:$0xff] %vm294, %v1352
        %1357 = vst.msk [vmem:[%s275 + $0x8] sm:$0xff] %vm294, %v1353
        %1358 = vst.msk [vmem:[%s275 + $0x10] sm:$0xff] %vm294, %v1354
        %1359 = vst.msk [vmem:[%s275 + $0x18] sm:$0xff] %vm294, %v1355
        %s1360 = sand.u32 %s175, 1
        %s1361 = scalar_lea.sflag [#allocation4], %s1360
        %s1362 = sand.u32 %s175, 1
        %s1363 = smul.addr %s1362, 32
        %s1364 = scalar_lea.vmem [#allocation3], %s1363
        // Predicated region
        $region49: #{conv_block_forward.3} parent=39 // pred_check
          %p1365 = pneg %p185
        $region50: #{conv_block_forward.3} parent=39 // pred_check_branch
          %1367 = sbr.rel (%p1365) target = $region52
        $region51: #{conv_block_forward.3} parent=39 // pred_region
          %s1368 = smul.u32 4, %s25
          %1370 = vsyncadd %s1361, 0
          %s1371 = sadd.s32 %s26, %s1368
          %s1372 = smul.addr %s24, 8
          %s1373 = sadd.s32 %s1371, %s1372
          %s1374 = smul.addr %s1373, 8
          %s1375 = scalar_lea.hbm %s5, %s1374
          %s1376 = sshll.u32 %s1364, 4
          %s1377 = int_to_ptr.vmem [resolvable:$true] %s1376
          %s1378 = sshll.u32 %s1375, 4
          %s1379 = int_to_ptr.hbm [resolvable:$true] %s1378
          %1384 = dma.vmem_to_hbm [thread:$0]  %s1377, 512, %s1379, %s1361, 128, 128, 8
        $region52: #{conv_block_forward.3} parent=39 // pred_fallthru
          _
      $region40: #{conv_block_forward.3} parent=5 // pred_fallthru
        _
      %p1385 = scmp.le.s32.totalorder 2, %s14
      // Predicated region
      $region53: #{conv_block_forward.3} parent=5 // pred_check
        %p1386 = pneg %p1385
      $region54: #{conv_block_forward.3} parent=5 // pred_check_branch
        %1388 = sbr.rel (%p1386) target = $region56
      $region55: #{conv_block_forward.3} parent=5 // pred_region
        %s1389 = ssub.s32 %s14, 2
        // Predicated region
        $region57: #{conv_block_forward.3} parent=55 // pred_check
          %p1390 = pneg %p191
        $region58: #{conv_block_forward.3} parent=55 // pred_check_branch
          %1392 = sbr.rel (%p1390) target = $region60
        $region59: #{conv_block_forward.3} parent=55 // pred_region
          %s1393 = sand.u32 %s176, 1
          %s1394 = scalar_lea.sflag [#allocation4], %s1393
          %s1395 = sand.u32 %s176, 1
          %s1396 = smul.addr %s1395, 32
          %s1397 = scalar_lea.vmem [#allocation3], %s1396
          %1399 = dma.done %s1394, 512
        $region60: #{conv_block_forward.3} parent=55 // pred_fallthru
          _
      $region56: #{conv_block_forward.3} parent=5 // pred_fallthru
        _
    $region6: #{conv_block_forward.3} parent=1 // loop_footer
      %s18 = sadd.s32 1, %s14
    $region7: #{conv_block_forward.3} parent=1 // loop_footer_branch
      %13 = sbr.rel target = $region3
    $region8: #{conv_block_forward.3} parent=1 // loop_exit
      _
    %1400 = vsyncpa [#allocation4], 1
    %s1401 = scalar_lea.sflag [#allocation4], 1
    %1402 = vsyncpa %s1401, 1

</llo_original>
